<compile_context>
chip_gen: v7x
topology: tpu7x:2x2x1
jax: 0.10.0
libtpu: 0.0.40
codegen_flags: <defaults>
</compile_context>

<pallas_src>
import jax
import jax.numpy as jnp
import numpy as np
from jax.experimental import pallas as pl
from jax.experimental.pallas import tpu as pltpu

# Module hyper-parameters (defaults of BinomialLoss.__init__ with sample_method on).
ALPHA = 40.0
MARGIN = 0.4
POS_MARGIN = 0.9
NEG_MARGIN = 0.1


def _binomial_loss_kernel(x_row_ref, x_col_ref, t_all_ref, t_col_ref,
                          loss_ref, mpos_ref, mneg_ref, sim_ref):
    k = pl.program_id(1)
    tm, n = sim_ref.shape
    tn = x_col_ref.shape[0]

    # ---- streamed pass over column tiles: fill this row tile's (TM, N) sim stripe (MXU) ----
    tile = jax.lax.dot_general(
        x_row_ref[...], x_col_ref[...],
        (((1,), (1,)), ((), ())),                 # contract feature dims, no explicit transpose
        preferred_element_type=jnp.float32)       # (TM, TN) f32 accumulation
    col0 = k * tn
    if tn % 128 == 0:                             # static: alignment hint for the dynamic store
        col0 = pl.multiple_of(col0, 128)
    sim_ref[:, pl.ds(col0, tn)] = tile

    # ---- finalize once the stripe for this row tile is complete ----
    @pl.when(k == pl.num_programs(1) - 1)
    def _finalize():
        sim = sim_ref[...]                        # (TM, N) f32
        t_all = t_all_ref[...]                    # (1, N)  int32, all labels
        t_row = t_col_ref[...]                    # (TM, 1) int32, this tile's labels
        same = t_row == t_all                     # (TM, N)
        diff = jnp.logical_not(same)

        # Positive pairs: same label AND sim < pos_margin (the diagonal goes through the
        # same filter, exactly like the PyTorch masked_select chain).
        pos_valid = jnp.logical_and(same, sim < POS_MARGIN)
        pos_cnt = jnp.sum(pos_valid.astype(jnp.float32), axis=1, keepdims=True)   # (TM,1)
        min_pos = jnp.min(jnp.where(pos_valid, sim, jnp.inf), axis=1, keepdims=True)

        # Negative pairs (sample_method): different label AND sim + 0.5 > min(pos)
        # AND sim > neg_margin.
        neg_valid = jnp.logical_and(
            diff, jnp.logical_and(sim + 0.5 > min_pos, sim > NEG_MARGIN))
        neg_cnt = jnp.sum(neg_valid.astype(jnp.float32), axis=1, keepdims=True)

        # Fused, numerically stable softplus (one exp + one log per sim element).
        z = jnp.where(same, -2.0 * (sim - MARGIN), ALPHA * (sim - MARGIN))
        sp = jnp.maximum(z, 0.0) + jnp.log(1.0 + jnp.exp(-jnp.abs(z)))
        pos_loss_sum = jnp.sum(jnp.where(pos_valid, sp, 0.0), axis=1, keepdims=True)
        neg_loss_sum = jnp.sum(jnp.where(neg_valid, sp, 0.0), axis=1, keepdims=True)

        # A row contributes only if it survived both `continue` guards
        # (>=1 positive and >=1 filtered negative).
        row_ok = jnp.logical_and(pos_cnt >= 1.0, neg_cnt >= 1.0)
        row_loss = (pos_loss_sum / jnp.maximum(pos_cnt, 1.0)
                    + neg_loss_sum / jnp.maximum(neg_cnt, 1.0))
        tile_total = jnp.sum(jnp.where(row_ok, row_loss, 0.0),
                             axis=0, keepdims=True)                        # (1, 1)
        loss_ref[...] = jnp.broadcast_to(tile_total, loss_ref.shape)       # lane-dense store

        # mean_pos_sim / mean_neg_sim come from the loop variables of the reference's *last*
        # iteration (global row n-1).  Each row tile computes the stats of its own last local
        # row (single-row reductions, negligible); the wrapper reads the tile owning row n-1.
        last = slice(tm - 1, tm)
        s_l = sim[last, :]
        pv_l, nv_l, df_l = pos_valid[last, :], neg_valid[last, :], diff[last, :]
        lp_cnt = pos_cnt[last, :]
        lp_sum = jnp.sum(jnp.where(pv_l, s_l, 0.0), axis=1, keepdims=True)
        mpos = lp_sum / lp_cnt                 # NaN if empty, matching torch.mean(empty)
        lnf_cnt = neg_cnt[last, :]
        lnf_sum = jnp.sum(jnp.where(nv_l, s_l, 0.0), axis=1, keepdims=True)
        lnr_cnt = jnp.sum(df_l.astype(jnp.float32), axis=1, keepdims=True)
        lnr_sum = jnp.sum(jnp.where(df_l, s_l, 0.0), axis=1, keepdims=True)
        # If the last row had >=1 positive, the sample_method filter on negatives ran;
        # otherwise neg_pair_ stayed the raw masked select.
        mneg = jnp.where(lp_cnt >= 1.0, lnf_sum / lnf_cnt, lnr_sum / lnr_cnt)
        mpos_ref[...] = jnp.broadcast_to(mpos, mpos_ref.shape)
        mneg_ref[...] = jnp.broadcast_to(mneg, mneg_ref.shape)


def _pick_tile(n, candidates):
    for t in candidates:
        if n % t == 0:
            return t
    return n   # fall back to a single tile; block == full dim is always legal


def binomial_loss(inputs, targets, nonorm=None):
    """Pallas TPU equivalent of BinomialLoss.forward (sample_method on, no Dynamic_margin).

    Returns (loss, prec, mean_pos_sim, mean_neg_sim)."""
    del nonorm  # unused by the reference forward
    n, d = inputs.shape
    tm = _pick_tile(n, (128,))              # row tile: keeps the (TM, N) stripe modest (v7x VMEM)
    tn = _pick_tile(n, (512, 256, 128))     # column tile: large to amortize per-grid-step overhead
    g, kk = n // tm, n // tn

    t_all = targets.astype(jnp.int32).reshape(1, n)
    t_col = targets.astype(jnp.int32).reshape(n, 1)

    out_shape = tuple(jax.ShapeDtypeStruct((8 * g, 128), jnp.float32) for _ in range(3))
    out_specs = tuple(pl.BlockSpec((8, 128), lambda i, k: (i, 0)) for _ in range(3))

    params = dict(dimension_semantics=("parallel", "arbitrary"))
    itemsize = jnp.dtype(inputs.dtype).itemsize
    est_vmem = 12 * 4 * tm * n + 4 * (tm + tn) * d * itemsize + (2 << 20)
    if est_vmem > (16 << 20):   # only override when the stripe outgrows the default scoped limit
        params["vmem_limit_bytes"] = int(min(max(est_vmem, 32 << 20), 64 << 20))

    loss_p, mpos_p, mneg_p = pl.pallas_call(
        _binomial_loss_kernel,
        out_shape=out_shape,
        grid=(g, kk),
        in_specs=[
            pl.BlockSpec((tm, d), lambda i, k: (i, 0)),   # row embeddings (per row tile)
            pl.BlockSpec((tn, d), lambda i, k: (k, 0)),   # column embeddings (streamed)
            pl.BlockSpec((1, n), lambda i, k: (0, 0)),    # all labels (tiny, stays resident)
            pl.BlockSpec((tm, 1), lambda i, k: (i, 0)),   # this row tile's labels (column form)
        ],
        out_specs=out_specs,
        scratch_shapes=[pltpu.VMEM((tm, n), jnp.float32)],   # per-row-tile similarity stripe
        compiler_params=pltpu.CompilerParams(**params),
    )(inputs, inputs, t_all, t_col)

    # Lane-dense per-row-tile partials -> final scalars (trivial wrapper-side reduction).
    loss = jnp.sum(loss_p[::8, 0]) / jnp.float32(n)
    # prec = c / n, but `c` is only incremented inside an unreachable branch of the
    # reference loop (`len(neg_pair) == 0` after a `continue` guard), so it is always 0.
    prec = 0.0
    mpos = mpos_p[8 * (g - 1), 0]
    mneg = mneg_p[8 * (g - 1), 0]
    return loss, prec, mpos, mneg


def _reference_numpy(inputs, targets):
    """Direct translation of the PyTorch forward for validation."""
    x = np.asarray(inputs, np.float64)
    t = np.asarray(targets)
    n = x.shape[0]
    sim = x @ x.T
    losses = []
    pos_pair_ = np.array([], np.float64)
    neg_pair_ = np.array([], np.float64)
    for i in range(n):
        pos_pair_ = sim[i][t == t[i]]
        pos_pair_ = pos_pair_[pos_pair_ < POS_MARGIN]
        neg_pair_ = sim[i][t != t[i]]
        if len(pos_pair_) < 1:
            continue
        neg_pair_ = neg_pair_[neg_pair_ + 0.5 > pos_pair_.min()]
        neg_pair_ = neg_pair_[neg_pair_ > NEG_MARGIN]
        if len(neg_pair_) < 1:
            continue
        pos_loss = np.mean(np.log(1 + np.exp(-2.0 * (pos_pair_ - MARGIN))))
        neg_loss = np.mean(np.log(1 + np.exp(ALPHA * (neg_pair_ - MARGIN))))
        losses.append(pos_loss + neg_loss)
    loss = sum(losses) / n
    mean_pos = float(np.mean(pos_pair_)) if len(pos_pair_) else float("nan")
    mean_neg = float(np.mean(neg_pair_)) if len(neg_pair_) else float("nan")
    return float(loss), 0.0, mean_pos, mean_neg


if __name__ == "__main__":
    key = jax.random.PRNGKey(0)
    n, d = 256, 128
    x = jax.random.normal(key, (n, d), dtype=jnp.float32)
    # L2-normalize rows (typical metric-learning embeddings) so similarities land in [-1, 1];
    # the kernel itself does not assume normalization (the stable softplus cannot overflow).
    x = x / jnp.linalg.norm(x, axis=1, keepdims=True)
    targets = jnp.arange(n, dtype=jnp.int32) % 8   # 8 classes, 32 samples each

    loss, prec, mean_pos, mean_neg = binomial_loss(x, targets, nonorm=None)
    jax.block_until_ready(loss)

    ref_loss, ref_prec, ref_pos, ref_neg = _reference_numpy(np.array(x), np.array(targets))
    np.testing.assert_allclose(float(loss), ref_loss, rtol=1e-3, atol=1e-5)
    np.testing.assert_allclose(float(mean_pos), ref_pos, rtol=1e-3, atol=1e-5)
    np.testing.assert_allclose(float(mean_neg), ref_neg, rtol=1e-3, atol=1e-5)
    assert prec == ref_prec

    print("KERNEL_OK")
</pallas_src>

<mosaic_0001>
module attributes {stable_mosaic.version = 11 : i64} {
  func.func @_binomial_loss_kernel(%arg0: i32, %arg1: i32, %arg2: memref<128x128xf32, #tpu.memory_space<vmem>>, %arg3: memref<256x128xf32, #tpu.memory_space<vmem>>, %arg4: memref<1x256xi32, #tpu.memory_space<vmem>>, %arg5: memref<128x1xi32, #tpu.memory_space<vmem>>, %arg6: memref<8x128xf32, #tpu.memory_space<vmem>>, %arg7: memref<8x128xf32, #tpu.memory_space<vmem>>, %arg8: memref<8x128xf32, #tpu.memory_space<vmem>>, %arg9: memref<128x256xf32, #tpu.memory_space<vmem>>) attributes {dimension_semantics = [#tpu.dimension_semantics<parallel>, #tpu.dimension_semantics<arbitrary>], iteration_bounds = array<i64: 2, 1>, scalar_prefetch = 0 : i64, scratch_operands = 1 : i64, tpu.core_type = #tpu.core_type<tc>, window_params = [{transform_indices = @transform_0, window_bounds = array<i64: 128, 128>}, {transform_indices = @transform_1, window_bounds = array<i64: 256, 128>}, {pipeline_mode = #tpu.pipeline_mode<synchronous>, transform_indices = @transform_2, window_bounds = array<i64: 1, 256>}, {transform_indices = @transform_3, window_bounds = array<i64: 128, 1>}, {transform_indices = @transform_4, window_bounds = array<i64: 8, 128>}, {transform_indices = @transform_5, window_bounds = array<i64: 8, 128>}, {transform_indices = @transform_6, window_bounds = array<i64: 8, 128>}]} {
    %c0 = arith.constant 0 : index
    %c0_0 = arith.constant 0 : index
    %0 = vector.load %arg2[%c0, %c0_0] : memref<128x128xf32, #tpu.memory_space<vmem>>, vector<128x128xf32>
    %c0_1 = arith.constant 0 : index
    %c0_2 = arith.constant 0 : index
    %1 = vector.load %arg3[%c0_1, %c0_2] : memref<256x128xf32, #tpu.memory_space<vmem>>, vector<256x128xf32>
    %cst = arith.constant dense<0.000000e+00> : vector<128x256xf32>
    %2 = tpu.matmul %0, %1, %cst {dimension_numbers = #tpu.dot_dimension_numbers<[1], [1], [0], [0], [0, 0, 1, 0], [], []>} : vector<128x128xf32>, vector<256x128xf32>, vector<128x256xf32> -> vector<128x256xf32>
    %c256_i32 = arith.constant 256 : i32
    %3 = arith.muli %arg1, %c256_i32 : i32
    %4 = tpu.assume_multiple %3, 128 : i32
    %c0_3 = arith.constant 0 : index
    %5 = arith.index_cast %4 : i32 to index
    %6 = vector.load %arg9[%c0_3, %5] : memref<128x256xf32, #tpu.memory_space<vmem>>, vector<128x256xf32>
    tpu.vector_store %arg9[%c0_3, %5], %2 {strides = array<i32>} : memref<128x256xf32, #tpu.memory_space<vmem>>, vector<128x256xf32>,
    %c0_i32 = arith.constant 0 : i32
    %7 = arith.cmpi eq, %arg1, %c0_i32 : i32
    %8 = arith.extui %7 : i1 to i32
    %c0_i32_4 = arith.constant 0 : i32
    %9 = arith.cmpi ne, %8, %c0_i32_4 : i32
    scf.if %9 {
      %c0_5 = arith.constant 0 : index
      %c0_6 = arith.constant 0 : index
      %10 = vector.load %arg9[%c0_5, %c0_6] : memref<128x256xf32, #tpu.memory_space<vmem>>, vector<128x256xf32>
      %c0_7 = arith.constant 0 : index
      %c0_8 = arith.constant 0 : index
      %11 = vector.load %arg4[%c0_7, %c0_8] : memref<1x256xi32, #tpu.memory_space<vmem>>, vector<1x256xi32>
      %c0_9 = arith.constant 0 : index
      %c0_10 = arith.constant 0 : index
      %12 = vector.load %arg5[%c0_9, %c0_10] : memref<128x1xi32, #tpu.memory_space<vmem>>, vector<128x1xi32>
      %13 = vector.broadcast %12 : vector<128x1xi32> to vector<128x256xi32>
      %14 = vector.broadcast %11 : vector<1x256xi32> to vector<128x256xi32>
      %15 = arith.cmpi eq, %13, %14 : vector<128x256xi32>
      %cst_11 = arith.constant dense<true> : vector<128x256xi1>
      %16 = arith.xori %15, %cst_11 : vector<128x256xi1>
      %cst_12 = arith.constant 0.899999976 : f32
      %17 = vector.broadcast %cst_12 : f32 to vector<128x256xf32>
      %18 = arith.cmpf olt, %10, %17 : vector<128x256xf32>
      %19 = arith.andi %15, %18 : vector<128x256xi1>
      %20 = arith.extui %19 : vector<128x256xi1> to vector<128x256xi32>
      %21 = arith.sitofp %20 : vector<128x256xi32> to vector<128x256xf32>
      %cst_13 = arith.constant dense<0.000000e+00> : vector<128xf32>
      %22 = vector.multi_reduction <add>, %21, %cst_13 [1] : vector<128x256xf32> to vector<128xf32>
      %23 = vector.shape_cast %22 : vector<128xf32> to vector<128x1xf32>
      %cst_14 = arith.constant 0x7F800000 : f32
      %24 = vector.broadcast %cst_14 : f32 to vector<128x256xf32>
      %25 = arith.select %19, %10, %24 : vector<128x256xi1>, vector<128x256xf32>
      %cst_15 = arith.constant dense<0x7F800000> : vector<128xf32>
      %26 = vector.multi_reduction <minimumf>, %25, %cst_15 [1] : vector<128x256xf32> to vector<128xf32>
      %27 = vector.shape_cast %26 : vector<128xf32> to vector<128x1xf32>
      %cst_16 = arith.constant 5.000000e-01 : f32
      %28 = vector.broadcast %cst_16 : f32 to vector<128x256xf32>
      %29 = arith.addf %10, %28 : vector<128x256xf32>
      %30 = vector.broadcast %27 : vector<128x1xf32> to vector<128x256xf32>
      %31 = arith.cmpf ogt, %29, %30 : vector<128x256xf32>
      %cst_17 = arith.constant 1.000000e-01 : f32
      %32 = vector.broadcast %cst_17 : f32 to vector<128x256xf32>
      %33 = arith.cmpf ogt, %10, %32 : vector<128x256xf32>
      %34 = arith.andi %31, %33 : vector<128x256xi1>
      %35 = arith.andi %16, %34 : vector<128x256xi1>
      %36 = arith.extui %35 : vector<128x256xi1> to vector<128x256xi32>
      %37 = arith.sitofp %36 : vector<128x256xi32> to vector<128x256xf32>
      %cst_18 = arith.constant dense<0.000000e+00> : vector<128xf32>
      %38 = vector.multi_reduction <add>, %37, %cst_18 [1] : vector<128x256xf32> to vector<128xf32>
      %39 = vector.shape_cast %38 : vector<128xf32> to vector<128x1xf32>
      %cst_19 = arith.constant 4.000000e-01 : f32
      %40 = vector.broadcast %cst_19 : f32 to vector<128x256xf32>
      %41 = arith.subf %10, %40 : vector<128x256xf32>
      %cst_20 = arith.constant -2.000000e+00 : f32
      %42 = vector.broadcast %cst_20 : f32 to vector<128x256xf32>
      %43 = arith.mulf %42, %41 : vector<128x256xf32>
      %cst_21 = arith.constant 4.000000e-01 : f32
      %44 = vector.broadcast %cst_21 : f32 to vector<128x256xf32>
      %45 = arith.subf %10, %44 : vector<128x256xf32>
      %cst_22 = arith.constant 4.000000e+01 : f32
      %46 = vector.broadcast %cst_22 : f32 to vector<128x256xf32>
      %47 = arith.mulf %46, %45 : vector<128x256xf32>
      %48 = arith.select %15, %43, %47 : vector<128x256xi1>, vector<128x256xf32>
      %cst_23 = arith.constant 0.000000e+00 : f32
      %49 = vector.broadcast %cst_23 : f32 to vector<128x256xf32>
      %50 = arith.maximumf %48, %49 : vector<128x256xf32>
      %51 = math.absf %48 : vector<128x256xf32>
      %cst_24 = arith.constant 0.000000e+00 : f32
      %52 = vector.broadcast %cst_24 : f32 to vector<128x256xf32>
      %53 = arith.subf %52, %51 : vector<128x256xf32>
      %54 = math.exp %53 : vector<128x256xf32>
      %cst_25 = arith.constant 1.000000e+00 : f32
      %55 = vector.broadcast %cst_25 : f32 to vector<128x256xf32>
      %56 = arith.addf %55, %54 : vector<128x256xf32>
      %57 = math.log %56 : vector<128x256xf32>
      %58 = arith.addf %50, %57 : vector<128x256xf32>
      %cst_26 = arith.constant 0.000000e+00 : f32
      %59 = vector.broadcast %cst_26 : f32 to vector<128x256xf32>
      %60 = arith.select %19, %58, %59 : vector<128x256xi1>, vector<128x256xf32>
      %cst_27 = arith.constant dense<0.000000e+00> : vector<128xf32>
      %61 = vector.multi_reduction <add>, %60, %cst_27 [1] : vector<128x256xf32> to vector<128xf32>
      %62 = vector.shape_cast %61 : vector<128xf32> to vector<128x1xf32>
      %cst_28 = arith.constant 0.000000e+00 : f32
      %63 = vector.broadcast %cst_28 : f32 to vector<128x256xf32>
      %64 = arith.select %35, %58, %63 : vector<128x256xi1>, vector<128x256xf32>
      %cst_29 = arith.constant dense<0.000000e+00> : vector<128xf32>
      %65 = vector.multi_reduction <add>, %64, %cst_29 [1] : vector<128x256xf32> to vector<128xf32>
      %66 = vector.shape_cast %65 : vector<128xf32> to vector<128x1xf32>
      %cst_30 = arith.constant 1.000000e+00 : f32
      %67 = vector.broadcast %cst_30 : f32 to vector<128x1xf32>
      %68 = arith.cmpf oge, %23, %67 : vector<128x1xf32>
      %cst_31 = arith.constant 1.000000e+00 : f32
      %69 = vector.broadcast %cst_31 : f32 to vector<128x1xf32>
      %70 = arith.cmpf oge, %39, %69 : vector<128x1xf32>
      %71 = arith.andi %68, %70 : vector<128x1xi1>
      %cst_32 = arith.constant 1.000000e+00 : f32
      %72 = vector.broadcast %cst_32 : f32 to vector<128x1xf32>
      %73 = arith.maximumf %23, %72 : vector<128x1xf32>
      %74 = arith.divf %62, %73 : vector<128x1xf32>
      %cst_33 = arith.constant 1.000000e+00 : f32
      %75 = vector.broadcast %cst_33 : f32 to vector<128x1xf32>
      %76 = arith.maximumf %39, %75 : vector<128x1xf32>
      %77 = arith.divf %66, %76 : vector<128x1xf32>
      %78 = arith.addf %74, %77 : vector<128x1xf32>
      %cst_34 = arith.constant 0.000000e+00 : f32
      %79 = vector.broadcast %cst_34 : f32 to vector<128x1xf32>
      %80 = arith.select %71, %78, %79 : vector<128x1xi1>, vector<128x1xf32>
      %cst_35 = arith.constant dense<0.000000e+00> : vector<1xf32>
      %81 = vector.multi_reduction <add>, %80, %cst_35 [0] : vector<128x1xf32> to vector<1xf32>
      %82 = vector.shape_cast %81 : vector<1xf32> to vector<1x1xf32>
      %83 = vector.shape_cast %82 : vector<1x1xf32> to vector<1x1xf32>
      %84 = vector.broadcast %83 : vector<1x1xf32> to vector<8x128xf32>
      %c0_36 = arith.constant 0 : index
      %c0_37 = arith.constant 0 : index
      %85 = vector.load %arg6[%c0_36, %c0_37] : memref<8x128xf32, #tpu.memory_space<vmem>>, vector<8x128xf32>
      tpu.vector_store %arg6[%c0_36, %c0_37], %84 {strides = array<i32>} : memref<8x128xf32, #tpu.memory_space<vmem>>, vector<8x128xf32>,
      %86 = vector.extract_strided_slice %10 {offsets = [127, 0], sizes = [1, 256], strides = [1, 1]} : vector<128x256xf32> to vector<1x256xf32>
      %87 = vector.extract_strided_slice %19 {offsets = [127, 0], sizes = [1, 256], strides = [1, 1]} : vector<128x256xi1> to vector<1x256xi1>
      %88 = vector.extract_strided_slice %35 {offsets = [127, 0], sizes = [1, 256], strides = [1, 1]} : vector<128x256xi1> to vector<1x256xi1>
      %89 = vector.extract_strided_slice %16 {offsets = [127, 0], sizes = [1, 256], strides = [1, 1]} : vector<128x256xi1> to vector<1x256xi1>
      %90 = vector.extract_strided_slice %23 {offsets = [127, 0], sizes = [1, 1], strides = [1, 1]} : vector<128x1xf32> to vector<1x1xf32>
      %cst_38 = arith.constant 0.000000e+00 : f32
      %91 = vector.broadcast %cst_38 : f32 to vector<1x256xf32>
      %92 = arith.select %87, %86, %91 : vector<1x256xi1>, vector<1x256xf32>
      %cst_39 = arith.constant dense<0.000000e+00> : vector<1xf32>
      %93 = vector.multi_reduction <add>, %92, %cst_39 [1] : vector<1x256xf32> to vector<1xf32>
      %94 = vector.shape_cast %93 : vector<1xf32> to vector<1x1xf32>
      %95 = arith.divf %94, %90 : vector<1x1xf32>
      %96 = vector.extract_strided_slice %39 {offsets = [127, 0], sizes = [1, 1], strides = [1, 1]} : vector<128x1xf32> to vector<1x1xf32>
      %cst_40 = arith.constant 0.000000e+00 : f32
      %97 = vector.broadcast %cst_40 : f32 to vector<1x256xf32>
      %98 = arith.select %88, %86, %97 : vector<1x256xi1>, vector<1x256xf32>
      %cst_41 = arith.constant dense<0.000000e+00> : vector<1xf32>
      %99 = vector.multi_reduction <add>, %98, %cst_41 [1] : vector<1x256xf32> to vector<1xf32>
      %100 = vector.shape_cast %99 : vector<1xf32> to vector<1x1xf32>
      %101 = arith.extui %89 : vector<1x256xi1> to vector<1x256xi32>
      %102 = arith.sitofp %101 : vector<1x256xi32> to vector<1x256xf32>
      %cst_42 = arith.constant dense<0.000000e+00> : vector<1xf32>
      %103 = vector.multi_reduction <add>, %102, %cst_42 [1] : vector<1x256xf32> to vector<1xf32>
      %104 = vector.shape_cast %103 : vector<1xf32> to vector<1x1xf32>
      %cst_43 = arith.constant 0.000000e+00 : f32
      %105 = vector.broadcast %cst_43 : f32 to vector<1x256xf32>
      %106 = arith.select %89, %86, %105 : vector<1x256xi1>, vector<1x256xf32>
      %cst_44 = arith.constant dense<0.000000e+00> : vector<1xf32>
      %107 = vector.multi_reduction <add>, %106, %cst_44 [1] : vector<1x256xf32> to vector<1xf32>
      %108 = vector.shape_cast %107 : vector<1xf32> to vector<1x1xf32>
      %cst_45 = arith.constant 1.000000e+00 : f32
      %109 = vector.broadcast %cst_45 : f32 to vector<1x1xf32>
      %110 = arith.cmpf oge, %90, %109 : vector<1x1xf32>
      %111 = arith.divf %100, %96 : vector<1x1xf32>
      %112 = arith.divf %108, %104 : vector<1x1xf32>
      %113 = arith.select %110, %111, %112 : vector<1x1xi1>, vector<1x1xf32>
      %114 = vector.shape_cast %95 : vector<1x1xf32> to vector<1x1xf32>
      %115 = vector.broadcast %114 : vector<1x1xf32> to vector<8x128xf32>
      %c0_46 = arith.constant 0 : index
      %c0_47 = arith.constant 0 : index
      %116 = vector.load %arg7[%c0_46, %c0_47] : memref<8x128xf32, #tpu.memory_space<vmem>>, vector<8x128xf32>
      tpu.vector_store %arg7[%c0_46, %c0_47], %115 {strides = array<i32>} : memref<8x128xf32, #tpu.memory_space<vmem>>, vector<8x128xf32>,
      %117 = vector.shape_cast %113 : vector<1x1xf32> to vector<1x1xf32>
      %118 = vector.broadcast %117 : vector<1x1xf32> to vector<8x128xf32>
      %c0_48 = arith.constant 0 : index
      %c0_49 = arith.constant 0 : index
      %119 = vector.load %arg8[%c0_48, %c0_49] : memref<8x128xf32, #tpu.memory_space<vmem>>, vector<8x128xf32>
      tpu.vector_store %arg8[%c0_48, %c0_49], %118 {strides = array<i32>} : memref<8x128xf32, #tpu.memory_space<vmem>>, vector<8x128xf32>,
    } else {
    }
    return
  }
  func.func @transform_0(%arg0: i32, %arg1: i32) -> (i32, i32) {
    %c0_i32 = arith.constant 0 : i32
    %c0_i32_0 = arith.constant 0 : i32
    return %arg0, %c0_i32 : i32, i32
  }
  func.func @transform_1(%arg0: i32, %arg1: i32) -> (i32, i32) {
    %c0_i32 = arith.constant 0 : i32
    %c0_i32_0 = arith.constant 0 : i32
    return %arg1, %c0_i32 : i32, i32
  }
  func.func @transform_2(%arg0: i32, %arg1: i32) -> (i32, i32) {
    %c0_i32 = arith.constant 0 : i32
    %c0_i32_0 = arith.constant 0 : i32
    %c0_i32_1 = arith.constant 0 : i32
    return %c0_i32, %c0_i32_0 : i32, i32
  }
  func.func @transform_3(%arg0: i32, %arg1: i32) -> (i32, i32) {
    %c0_i32 = arith.constant 0 : i32
    %c0_i32_0 = arith.constant 0 : i32
    return %arg0, %c0_i32 : i32, i32
  }
  func.func @transform_4(%arg0: i32, %arg1: i32) -> (i32, i32) {
    %c0_i32 = arith.constant 0 : i32
    %c0_i32_0 = arith.constant 0 : i32
    return %arg0, %c0_i32 : i32, i32
  }
  func.func @transform_5(%arg0: i32, %arg1: i32) -> (i32, i32) {
    %c0_i32 = arith.constant 0 : i32
    %c0_i32_0 = arith.constant 0 : i32
    return %arg0, %c0_i32 : i32, i32
  }
  func.func @transform_6(%arg0: i32, %arg1: i32) -> (i32, i32) {
    %c0_i32 = arith.constant 0 : i32
    %c0_i32_0 = arith.constant 0 : i32
    return %arg0, %c0_i32 : i32, i32
  }
}

</mosaic_0001>

<llo_original>
// kernel: tpu_custom_call.1
$region0: #{tpu_custom_call.1}
  #allocation0 [shape = 'u32[]', space=smem, size = 0x4, offset = 0x4, fixed_abs, tag = 'smem constant byte address 0x4 - core index']
  #allocation1 [shape = 'u32[144,128]{1,0:T(1,128)}', space=vmem, size = 0x12000, scoped, tag = 'internal scratch']
  #allocation2 [shape = 'f32[128,256]{1,0:T(8,128)}', space=vmem, size = 0x20000, scoped, tag = 'scratch operand']
  %s0 = inlined_call_operand.vmem [shape: f32[256,128], index: 0, kind: input, shape index: {}]
  %s1 = inlined_call_operand.hbm [shape: f32[256,128], index: 1, kind: input, shape index: {}]
  %s2 = inlined_call_operand.vmem [shape: s32[1,256], index: 2, kind: input, shape index: {}]
  %s3 = inlined_call_operand.vmem [shape: s32[256,1], index: 3, kind: input, shape index: {}]
  %s4 = inlined_call_operand.hbm [shape: f32[16,128], index: 4, kind: output, shape index: {0}]
  %s5 = inlined_call_operand.hbm [shape: f32[16,128], index: 5, kind: output, shape index: {1}]
  %s6 = inlined_call_operand.hbm [shape: f32[16,128], index: 6, kind: output, shape index: {2}]
  %7 = xla_tuple %s4, %s5, %s6
  %s8 = sld [smem:[#allocation0]]
  $region73: #{tpu_custom_call.1} parent=0
    _
  %s10 = ssub.s32 1, %s8
  %s11 = scalar_select 0, %s10, %s8
  $region1: #{tpu_custom_call.1} parent=0
    #allocation3 [shape = 'u8[131072]{0}', space=vmem, size = 0x20000, scoped, tag = 'input window, operand 1, single buffered']
    #allocation4 [shape = 's32[2]{0}', space=sflag, size = 0x8, scoped, tag = 'scoped memory for tpu_custom_call.1']
    #allocation5 [shape = 's32[2]{0}', space=sflag, size = 0x8, scoped, tag = 'scoped memory for tpu_custom_call.1']
    #allocation6 [shape = 'u8[8192]{0}', space=vmem, size = 0x2000, scoped, tag = 'output window, operand 0']
    #allocation7 [shape = 'u8[8192]{0}', space=vmem, size = 0x2000, scoped, tag = 'output window, operand 1']
    #allocation8 [shape = 's32[2]{0}', space=sflag, size = 0x8, scoped, tag = 'scoped memory for tpu_custom_call.1']
    #allocation9 [shape = 'u8[8192]{0}', space=vmem, size = 0x2000, scoped, tag = 'output window, operand 2']
    %12 = vsyncpa [#allocation4], 0
    %13 = vsyncpa [#allocation5], 0
    %s14 = scalar_lea.sflag [#allocation5], 1
    %15 = vsyncpa %s14, 0
    %16 = vsyncpa [#allocation8], 0
    %s17 = scalar_lea.sflag [#allocation8], 1
    %18 = vsyncpa %s17, 0
    loop: start=0, step=1, limit=4
    $region2: #{tpu_custom_call.1} parent=1 // loop_pre_header
      _
    $region3: #{tpu_custom_call.1} parent=1 // loop_header
      %s20 = sphi 0, %s24
      %p21 = scmp.ge.s32.totalorder %s20, 4
      %s27 = sphi 0, %s39
      %s28 = sphi 0, %s35
      %s29 = sphi 0, %s27
      %s30 = sphi 0, %s28
      %s31 = sphi 0, %s29
      %s32 = sphi 0, %s30
      %s42 = sphi 0, %s44
      %s45 = sphi 0, %s42
      %s46 = sphi 0, %s45
      %s62 = sphi 0, %s46
      %s68 = sphi 0, %s70
      %s71 = sphi 0, %s68
      %s72 = sphi 0, %s71
      %s88 = sphi 0, %s72
      %s92 = sphi 0, %s92
      %s94 = sphi 0, %s92
      %s95 = sphi 0, %s94
      %s109 = sphi 0, %s95
      %s115 = sphi 0, %s117
      %s118 = sphi 0, %s115
      %s119 = sphi 0, %s118
      %s135 = sphi 0, %s119
      %s141 = sphi 0, %s143
      %s144 = sphi 0, %s141
      %s145 = sphi 0, %s144
      %s161 = sphi 0, %s145
      %s167 = sphi 0, %s169
      %s170 = sphi 0, %s167
      %s171 = sphi 0, %s170
      %s187 = sphi 0, %s171
      %s193 = sphi 0, %s195
      %s196 = sphi 0, %s193
      %s197 = sphi 0, %s196
      %s213 = sphi 0, %s197
    $region4: #{tpu_custom_call.1} parent=1 // loop_header_branch
      %23 = sbr.rel (%p21) target = $region8
    $region5: #{tpu_custom_call.1} parent=1 // loop_body
      %s25 = ssub.s32 %s20, 1
      %s26 = ssub.s32 %s20, 2
      %s33 = sadd.s32 1, %s28
      %p34 = scmp.ge.s32.totalorder %s33, 1
      %s35 = scalar_select %p34, 0, %s33
      %s36 = sadd.s32 1, %s27
      %s37 = scalar_select %p34, %s36, %s27
      %p38 = scmp.ge.s32.totalorder %s37, 2
      %s39 = scalar_select %p38, 0, %s37
      %s40 = ssub.s32 %s27, %s39
      %p41 = scmp.eq.s32.totalorder %s40, 0
      %s43 = sadd.s32 %s42, 1
      %s44 = scalar_select %p41, %s42, %s43
      %p47 = pneg %p41
      %p48 = scmp.eq.s32.totalorder %s20, 1
      %p49 = por %p47, %p48
      %p50 = scmp.ne.s32.totalorder %s42, %s45
      %p51 = scmp.eq.s32.totalorder %s20, 0
      %p52 = por %p50, %p51
      %p53 = scmp.ne.s32.totalorder %s42, %s45
      %p54 = scmp.eq.s32.totalorder %s25, 1
      %p55 = por %p53, %p54
      %p56 = scmp.ne.s32.totalorder %s45, %s46
      %p57 = scmp.eq.s32.totalorder %s25, 0
      %p58 = por %p56, %p57
      %p59 = scmp.ne.s32.totalorder %s45, %s46
      %p60 = scmp.eq.s32.totalorder %s26, 1
      %p61 = por %p59, %p60
      %p63 = scmp.ne.s32.totalorder %s46, %s62
      %p64 = scmp.eq.s32.totalorder %s26, 0
      %p65 = por %p63, %p64
      %s66 = ssub.s32 %s28, %s35
      %p67 = scmp.eq.s32.totalorder %s66, 0
      %s69 = sadd.s32 %s68, 1
      %s70 = scalar_select %p67, %s68, %s69
      %p73 = pneg %p67
      %p74 = scmp.eq.s32.totalorder %s20, 1
      %p75 = por %p73, %p74
      %p76 = scmp.ne.s32.totalorder %s68, %s71
      %p77 = scmp.eq.s32.totalorder %s20, 0
      %p78 = por %p76, %p77
      %p79 = scmp.ne.s32.totalorder %s68, %s71
      %p80 = scmp.eq.s32.totalorder %s25, 1
      %p81 = por %p79, %p80
      %p82 = scmp.ne.s32.totalorder %s71, %s72
      %p83 = scmp.eq.s32.totalorder %s25, 0
      %p84 = por %p82, %p83
      %p85 = scmp.ne.s32.totalorder %s71, %s72
      %p86 = scmp.eq.s32.totalorder %s26, 1
      %p87 = por %p85, %p86
      %p89 = scmp.ne.s32.totalorder %s72, %s88
      %p90 = scmp.eq.s32.totalorder %s26, 0
      %p91 = por %p89, %p90
      %s93 = sadd.s32 %s92, 1
      %p96 = scmp.eq.s32.totalorder %s20, 1
      %p97 = scmp.ne.s32.totalorder %s92, %s94
      %p98 = scmp.eq.s32.totalorder %s20, 0
      %p99 = por %p97, %p98
      %p100 = scmp.ne.s32.totalorder %s92, %s94
      %p101 = scmp.eq.s32.totalorder %s25, 1
      %p102 = por %p100, %p101
      %p103 = scmp.ne.s32.totalorder %s94, %s95
      %p104 = scmp.eq.s32.totalorder %s25, 0
      %p105 = por %p103, %p104
      %p106 = scmp.ne.s32.totalorder %s94, %s95
      %p107 = scmp.eq.s32.totalorder %s26, 1
      %p108 = por %p106, %p107
      %p110 = scmp.ne.s32.totalorder %s95, %s109
      %p111 = scmp.eq.s32.totalorder %s26, 0
      %p112 = por %p110, %p111
      %s113 = ssub.s32 %s27, %s39
      %p114 = scmp.eq.s32.totalorder %s113, 0
      %s116 = sadd.s32 %s115, 1
      %s117 = scalar_select %p114, %s115, %s116
      %p120 = pneg %p114
      %p121 = scmp.eq.s32.totalorder %s20, 1
      %p122 = por %p120, %p121
      %p123 = scmp.ne.s32.totalorder %s115, %s118
      %p124 = scmp.eq.s32.totalorder %s20, 0
      %p125 = por %p123, %p124
      %p126 = scmp.ne.s32.totalorder %s115, %s118
      %p127 = scmp.eq.s32.totalorder %s25, 1
      %p128 = por %p126, %p127
      %p129 = scmp.ne.s32.totalorder %s118, %s119
      %p130 = scmp.eq.s32.totalorder %s25, 0
      %p131 = por %p129, %p130
      %p132 = scmp.ne.s32.totalorder %s118, %s119
      %p133 = scmp.eq.s32.totalorder %s26, 1
      %p134 = por %p132, %p133
      %p136 = scmp.ne.s32.totalorder %s119, %s135
      %p137 = scmp.eq.s32.totalorder %s26, 0
      %p138 = por %p136, %p137
      %s139 = ssub.s32 %s27, %s39
      %p140 = scmp.eq.s32.totalorder %s139, 0
      %s142 = sadd.s32 %s141, 1
      %s143 = scalar_select %p140, %s141, %s142
      %p146 = pneg %p140
      %p147 = scmp.eq.s32.totalorder %s20, 1
      %p148 = por %p146, %p147
      %p149 = scmp.ne.s32.totalorder %s141, %s144
      %p150 = scmp.eq.s32.totalorder %s20, 0
      %p151 = por %p149, %p150
      %p152 = scmp.ne.s32.totalorder %s141, %s144
      %p153 = scmp.eq.s32.totalorder %s25, 1
      %p154 = por %p152, %p153
      %p155 = scmp.ne.s32.totalorder %s144, %s145
      %p156 = scmp.eq.s32.totalorder %s25, 0
      %p157 = por %p155, %p156
      %p158 = scmp.ne.s32.totalorder %s144, %s145
      %p159 = scmp.eq.s32.totalorder %s26, 1
      %p160 = por %p158, %p159
      %p162 = scmp.ne.s32.totalorder %s145, %s161
      %p163 = scmp.eq.s32.totalorder %s26, 0
      %p164 = por %p162, %p163
      %s165 = ssub.s32 %s27, %s39
      %p166 = scmp.eq.s32.totalorder %s165, 0
      %s168 = sadd.s32 %s167, 1
      %s169 = scalar_select %p166, %s167, %s168
      %p172 = pneg %p166
      %p173 = scmp.eq.s32.totalorder %s20, 1
      %p174 = por %p172, %p173
      %p175 = scmp.ne.s32.totalorder %s167, %s170
      %p176 = scmp.eq.s32.totalorder %s20, 0
      %p177 = por %p175, %p176
      %p178 = scmp.ne.s32.totalorder %s167, %s170
      %p179 = scmp.eq.s32.totalorder %s25, 1
      %p180 = por %p178, %p179
      %p181 = scmp.ne.s32.totalorder %s170, %s171
      %p182 = scmp.eq.s32.totalorder %s25, 0
      %p183 = por %p181, %p182
      %p184 = scmp.ne.s32.totalorder %s170, %s171
      %p185 = scmp.eq.s32.totalorder %s26, 1
      %p186 = por %p184, %p185
      %p188 = scmp.ne.s32.totalorder %s171, %s187
      %p189 = scmp.eq.s32.totalorder %s26, 0
      %p190 = por %p188, %p189
      %s191 = ssub.s32 %s27, %s39
      %p192 = scmp.eq.s32.totalorder %s191, 0
      %s194 = sadd.s32 %s193, 1
      %s195 = scalar_select %p192, %s193, %s194
      %p198 = pneg %p192
      %p199 = scmp.eq.s32.totalorder %s20, 1
      %p200 = por %p198, %p199
      %p201 = scmp.ne.s32.totalorder %s193, %s196
      %p202 = scmp.eq.s32.totalorder %s20, 0
      %p203 = por %p201, %p202
      %p204 = scmp.ne.s32.totalorder %s193, %s196
      %p205 = scmp.eq.s32.totalorder %s25, 1
      %p206 = por %p204, %p205
      %p207 = scmp.ne.s32.totalorder %s196, %s197
      %p208 = scmp.eq.s32.totalorder %s25, 0
      %p209 = por %p207, %p208
      %p210 = scmp.ne.s32.totalorder %s196, %s197
      %p211 = scmp.eq.s32.totalorder %s26, 1
      %p212 = por %p210, %p211
      %p214 = scmp.ne.s32.totalorder %s197, %s213
      %p215 = scmp.eq.s32.totalorder %s26, 0
      %p216 = por %p214, %p215
      %p217 = scmp.le.s32.totalorder 1, %s20
      %p218 = scmp.lt.s32.totalorder %s20, 3
      %p219 = pnand %p217, %p218
      %p220 = pneg %p219
      // Predicated region
      $region9: #{tpu_custom_call.1} parent=5 // pred_check
        _
      $region10: #{tpu_custom_call.1} parent=5 // pred_check_branch
        %222 = sbr.rel (%p219) target = $region12
      $region11: #{tpu_custom_call.1} parent=5 // pred_region
        %s223 = ssub.s32 %s20, 1
        // Predicated region
        $region13: #{tpu_custom_call.1} parent=11 // pred_check
          %p224 = pneg %p84
        $region14: #{tpu_custom_call.1} parent=11 // pred_check_branch
          %226 = sbr.rel (%p224) target = $region16
        $region15: #{tpu_custom_call.1} parent=11 // pred_region
          %s227 = smul.u32 32, %s30
          %s229 = ssub.s32 4096, 4096
          %230 = vsyncadd [#allocation4], %s229
          %s231 = smul.addr %s227, 128
          %s232 = scalar_lea.hbm %s1, %s231
          %s233 = sshll.u32 [#allocation3], 4
          %s234 = int_to_ptr.vmem [resolvable:$true] %s233
          %239 = dma.hbm_to_vmem [thread:$0]  %s232, 4096, %s234, [#allocation4], 128, 128, 8
        $region16: #{tpu_custom_call.1} parent=11 // pred_fallthru
          _
        // Predicated region
        $region17: #{tpu_custom_call.1} parent=11 // pred_check
          %p240 = pneg %p105
        $region18: #{tpu_custom_call.1} parent=11 // pred_check_branch
          %242 = sbr.rel (%p240) target = $region20
        $region19: #{tpu_custom_call.1} parent=11 // pred_region
          _
        $region20: #{tpu_custom_call.1} parent=11 // pred_fallthru
          _
      $region12: #{tpu_custom_call.1} parent=5 // pred_fallthru
        _
      %p243 = scmp.lt.s32.totalorder %s20, 2
      // Predicated region
      $region21: #{tpu_custom_call.1} parent=5 // pred_check
        %p244 = pneg %p243
      $region22: #{tpu_custom_call.1} parent=5 // pred_check_branch
        %246 = sbr.rel (%p244) target = $region24
      $region23: #{tpu_custom_call.1} parent=5 // pred_region
        // Predicated region
        $region25: #{tpu_custom_call.1} parent=23 // pred_check
          %p247 = pneg %p52
        $region26: #{tpu_custom_call.1} parent=23 // pred_check_branch
          %249 = sbr.rel (%p247) target = $region28
        $region27: #{tpu_custom_call.1} parent=23 // pred_region
          %s250 = smul.u32 16, %s27
          %p251 = scmp.lt.s32.totalorder %s250, 31
          %s252 = scalar_select %p251, %s250, 31
          %s253 = smul.addr %s252, 8
          %s254 = scalar_lea.vmem %s0, %s253
          %s255 = smul.u32 16, %s27
        $region28: #{tpu_custom_call.1} parent=23 // pred_fallthru
          _
        // Predicated region
        $region29: #{tpu_custom_call.1} parent=23 // pred_check
          %p256 = pneg %p125
        $region30: #{tpu_custom_call.1} parent=23 // pred_check_branch
          %258 = sbr.rel (%p256) target = $region32
        $region31: #{tpu_custom_call.1} parent=23 // pred_region
          %s259 = smul.u32 16, %s27
          %p260 = scmp.lt.s32.totalorder %s259, 31
          %s261 = scalar_select %p260, %s259, 31
          %s262 = smul.addr %s261, 8
          %s263 = scalar_lea.vmem %s3, %s262
          %s264 = smul.u32 16, %s27
        $region32: #{tpu_custom_call.1} parent=23 // pred_fallthru
          _
      $region24: #{tpu_custom_call.1} parent=5 // pred_fallthru
        _
      %p265 = scmp.le.s32.totalorder 1, %s20
      %p266 = scmp.lt.s32.totalorder %s20, 3
      %p267 = pnand %p265, %p266
      %p268 = pneg %p267
      // Predicated region
      $region33: #{tpu_custom_call.1} parent=5 // pred_check
        _
      $region34: #{tpu_custom_call.1} parent=5 // pred_check_branch
        %270 = sbr.rel (%p267) target = $region36
      $region35: #{tpu_custom_call.1} parent=5 // pred_region
        %s271 = ssub.s32 %s20, 1
        // Predicated region
        $region37: #{tpu_custom_call.1} parent=35 // pred_check
          %p272 = pneg %p84
        $region38: #{tpu_custom_call.1} parent=35 // pred_check_branch
          %274 = sbr.rel (%p272) target = $region40
        $region39: #{tpu_custom_call.1} parent=35 // pred_region
          %275 = dma.done [#allocation4], 4096
        $region40: #{tpu_custom_call.1} parent=35 // pred_fallthru
          _
        %s276 = smul.u32 16, %s29
        %p277 = scmp.lt.s32.totalorder %s276, 31
        %s278 = scalar_select %p277, %s276, 31
        %s279 = smul.addr %s278, 8
        %s280 = scalar_lea.vmem %s0, %s279
        %p281 = pneg %p58
        %p282 = pneg %p55
        %p283 = pneg %p84
        %p284 = pneg %p81
        %p285 = pneg %p105
        %p286 = pneg %p102
        %s287 = smul.u32 16, %s29
        %p288 = scmp.lt.s32.totalorder %s287, 31
        %s289 = scalar_select %p288, %s287, 31
        %s290 = smul.addr %s289, 8
        %s291 = scalar_lea.vmem %s3, %s290
        %p292 = pneg %p131
        %p293 = pneg %p128
        %p294 = pneg %p157
        %p295 = pneg %p154
        %s296 = sand.u32 %s144, 1
        %s297 = scalar_lea.sflag [#allocation5], %s296
        %s298 = sand.u32 %s144, 1
        %s299 = smul.addr %s298, 8
        %s300 = scalar_lea.vmem [#allocation6], %s299
        %p301 = pneg %p183
        %p302 = pneg %p180
        %s303 = sand.u32 %s25, 1
        %s304 = scalar_lea.sflag [#allocation8], %s303
        %s305 = sand.u32 %s170, 1
        %s306 = smul.addr %s305, 8
        %s307 = scalar_lea.vmem [#allocation7], %s306
        %p308 = pneg %p209
        %p309 = pneg %p206
        %s310 = sand.u32 %s25, 1
        %s311 = scalar_lea.sflag [#allocation8], %s310
        %s312 = sand.u32 %s196, 1
        %s313 = smul.addr %s312, 8
        %s314 = scalar_lea.vmem [#allocation9], %s313
        %s315 = smul.u32 16, %s29
        %p316 = scmp.lt.s32.totalorder %s315, 31
        %s317 = scalar_select %p316, %s315, 31
        %s318 = smul.addr %s317, 8
        %s319 = scalar_lea.vmem %s0, %s318
        %s320 = smul.u32 16, %s29
        %s321 = smul.u32 32, %s30
        %s322 = smul.u32 16, %s29
        %p323 = scmp.lt.s32.totalorder %s322, 31
        %s324 = scalar_select %p323, %s322, 31
        %s325 = smul.addr %s324, 8
        %s326 = scalar_lea.vmem %s3, %s325
        %s327 = smul.u32 16, %s29
        %v328 = vld [vmem:[%s319] sm:$0xff]
        %v329 = vld [vmem:[%s319 + $0x8] sm:$0xff]
        %v330 = vld [vmem:[%s319 + $0x10] sm:$0xff]
        %v331 = vld [vmem:[%s319 + $0x18] sm:$0xff]
        %v332 = vld [vmem:[%s319 + $0x20] sm:$0xff]
        %v333 = vld [vmem:[%s319 + $0x28] sm:$0xff]
        %v334 = vld [vmem:[%s319 + $0x30] sm:$0xff]
        %v335 = vld [vmem:[%s319 + $0x38] sm:$0xff]
        %v336 = vld [vmem:[%s319 + $0x40] sm:$0xff]
        %v337 = vld [vmem:[%s319 + $0x48] sm:$0xff]
        %v338 = vld [vmem:[%s319 + $0x50] sm:$0xff]
        %v339 = vld [vmem:[%s319 + $0x58] sm:$0xff]
        %v340 = vld [vmem:[%s319 + $0x60] sm:$0xff]
        %v341 = vld [vmem:[%s319 + $0x68] sm:$0xff]
        %v342 = vld [vmem:[%s319 + $0x70] sm:$0xff]
        %v343 = vld [vmem:[%s319 + $0x78] sm:$0xff]
        %v344 = vld [vmem:[#allocation3] sm:$0xff]
        %v345 = vld [vmem:[#allocation3 + $0x8] sm:$0xff]
        %v346 = vld [vmem:[#allocation3 + $0x10] sm:$0xff]
        %v347 = vld [vmem:[#allocation3 + $0x18] sm:$0xff]
        %v348 = vld [vmem:[#allocation3 + $0x20] sm:$0xff]
        %v349 = vld [vmem:[#allocation3 + $0x28] sm:$0xff]
        %v350 = vld [vmem:[#allocation3 + $0x30] sm:$0xff]
        %v351 = vld [vmem:[#allocation3 + $0x38] sm:$0xff]
        %v352 = vld [vmem:[#allocation3 + $0x40] sm:$0xff]
        %v353 = vld [vmem:[#allocation3 + $0x48] sm:$0xff]
        %v354 = vld [vmem:[#allocation3 + $0x50] sm:$0xff]
        %v355 = vld [vmem:[#allocation3 + $0x58] sm:$0xff]
        %v356 = vld [vmem:[#allocation3 + $0x60] sm:$0xff]
        %v357 = vld [vmem:[#allocation3 + $0x68] sm:$0xff]
        %v358 = vld [vmem:[#allocation3 + $0x70] sm:$0xff]
        %v359 = vld [vmem:[#allocation3 + $0x78] sm:$0xff]
        %v360 = vld [vmem:[#allocation3 + $0x80] sm:$0xff]
        %v361 = vld [vmem:[#allocation3 + $0x88] sm:$0xff]
        %v362 = vld [vmem:[#allocation3 + $0x90] sm:$0xff]
        %v363 = vld [vmem:[#allocation3 + $0x98] sm:$0xff]
        %v364 = vld [vmem:[#allocation3 + $0xa0] sm:$0xff]
        %v365 = vld [vmem:[#allocation3 + $0xa8] sm:$0xff]
        %v366 = vld [vmem:[#allocation3 + $0xb0] sm:$0xff]
        %v367 = vld [vmem:[#allocation3 + $0xb8] sm:$0xff]
        %v368 = vld [vmem:[#allocation3 + $0xc0] sm:$0xff]
        %v369 = vld [vmem:[#allocation3 + $0xc8] sm:$0xff]
        %v370 = vld [vmem:[#allocation3 + $0xd0] sm:$0xff]
        %v371 = vld [vmem:[#allocation3 + $0xd8] sm:$0xff]
        %v372 = vld [vmem:[#allocation3 + $0xe0] sm:$0xff]
        %v373 = vld [vmem:[#allocation3 + $0xe8] sm:$0xff]
        %v374 = vld [vmem:[#allocation3 + $0xf0] sm:$0xff]
        %v375 = vld [vmem:[#allocation3 + $0xf8] sm:$0xff]
        %376 = vmatprep.subr.mxu0 0.0
        %377 = vmatpush1.xpose.msra.mxu0 %v344
        %378 = vmatprep.subr.mxu0 0.0
        %379 = vmatpush1.xpose.msra.mxu0 %v345
        %380 = vmatprep.subr.mxu0 0.0
        %381 = vmatpush1.xpose.msra.mxu0 %v346
        %382 = vmatprep.subr.mxu0 0.0
        %383 = vmatpush1.xpose.msra.mxu0 %v347
        %384 = vmatprep.subr.mxu0 0.0
        %385 = vmatpush1.xpose.msra.mxu0 %v348
        %386 = vmatprep.subr.mxu0 0.0
        %387 = vmatpush1.xpose.msra.mxu0 %v349
        %388 = vmatprep.subr.mxu0 0.0
        %389 = vmatpush1.xpose.msra.mxu0 %v350
        %390 = vmatprep.subr.mxu0 0.0
        %391 = vmatpush1.xpose.msra.mxu0 %v351
        %392 = vmatprep.subr.mxu0 0.0
        %393 = vmatpush1.xpose.msra.mxu0 %v352
        %394 = vmatprep.subr.mxu0 0.0
        %395 = vmatpush1.xpose.msra.mxu0 %v353
        %396 = vmatprep.subr.mxu0 0.0
        %397 = vmatpush1.xpose.msra.mxu0 %v354
        %398 = vmatprep.subr.mxu0 0.0
        %399 = vmatpush1.xpose.msra.mxu0 %v355
        %400 = vmatprep.subr.mxu0 0.0
        %401 = vmatpush1.xpose.msra.mxu0 %v356
        %402 = vmatprep.subr.mxu0 0.0
        %403 = vmatpush1.xpose.msra.mxu0 %v357
        %404 = vmatprep.subr.mxu0 0.0
        %405 = vmatpush1.xpose.msra.mxu0 %v358
        %406 = vmatprep.subr.mxu0 0.0
        %407 = vmatpush1.xpose.msra.mxu0 %v359
        %408 = vmatprep.subr.mxu0 0.0
        %409 = vmatpush1.xpose.msra.mxu0 %v360
        %410 = vmatprep.subr.mxu0 0.0
        %411 = vmatpush1.xpose.msra.mxu0 %v361
        %412 = vmatprep.subr.mxu0 0.0
        %413 = vmatpush1.xpose.msra.mxu0 %v362
        %414 = vmatprep.subr.mxu0 0.0
        %415 = vmatpush1.xpose.msra.mxu0 %v363
        %416 = vmatprep.subr.mxu0 0.0
        %417 = vmatpush1.xpose.msra.mxu0 %v364
        %418 = vmatprep.subr.mxu0 0.0
        %419 = vmatpush1.xpose.msra.mxu0 %v365
        %420 = vmatprep.subr.mxu0 0.0
        %421 = vmatpush1.xpose.msra.mxu0 %v366
        %422 = vmatprep.subr.mxu0 0.0
        %423 = vmatpush1.xpose.msra.mxu0 %v367
        %424 = vmatprep.subr.mxu0 0.0
        %425 = vmatpush1.xpose.msra.mxu0 %v368
        %426 = vmatprep.subr.mxu0 0.0
        %427 = vmatpush1.xpose.msra.mxu0 %v369
        %428 = vmatprep.subr.mxu0 0.0
        %429 = vmatpush1.xpose.msra.mxu0 %v370
        %430 = vmatprep.subr.mxu0 0.0
        %431 = vmatpush1.xpose.msra.mxu0 %v371
        %432 = vmatprep.subr.mxu0 0.0
        %433 = vmatpush1.xpose.msra.mxu0 %v372
        %434 = vmatprep.subr.mxu0 0.0
        %435 = vmatpush1.xpose.msra.mxu0 %v373
        %436 = vmatprep.subr.mxu0 0.0
        %437 = vmatpush1.xpose.msra.mxu0 %v374
        %438 = vmatprep.subr.mxu0 0.0
        %439 = vmatpush1.xpose.msra.mxu0 %v375
        %440 = vmatprep.mubr.f32.mxu0 0.0
        %441 = vmatmul.mubr.f32.gmra.mrb[0].mxu0 %v328
        %v442 = vpop.f32.mrb[0].mxu0
        %v443 = vadd.f32 0.0, %v442
        %v444 = vpop.f32.mrb[0].mxu0
        %v445 = vadd.f32 0.0, %v444
        %446 = vmatprep.mubr.f32.mxu0 0.0
        %447 = vmatmul.mubr.f32.gmra.mrb[0].mxu0 %v329
        %v448 = vpop.f32.mrb[0].mxu0
        %v449 = vadd.f32 0.0, %v448
        %v450 = vpop.f32.mrb[0].mxu0
        %v451 = vadd.f32 0.0, %v450
        %452 = vmatprep.mubr.f32.mxu0 0.0
        %453 = vmatmul.mubr.f32.gmra.mrb[0].mxu0 %v330
        %v454 = vpop.f32.mrb[0].mxu0
        %v455 = vadd.f32 0.0, %v454
        %v456 = vpop.f32.mrb[0].mxu0
        %v457 = vadd.f32 0.0, %v456
        %458 = vmatprep.mubr.f32.mxu0 0.0
        %459 = vmatmul.mubr.f32.gmra.mrb[0].mxu0 %v331
        %v460 = vpop.f32.mrb[0].mxu0
        %v461 = vadd.f32 0.0, %v460
        %v462 = vpop.f32.mrb[0].mxu0
        %v463 = vadd.f32 0.0, %v462
        %464 = vmatprep.mubr.f32.mxu0 0.0
        %465 = vmatmul.mubr.f32.gmra.mrb[0].mxu0 %v332
        %v466 = vpop.f32.mrb[0].mxu0
        %v467 = vadd.f32 0.0, %v466
        %v468 = vpop.f32.mrb[0].mxu0
        %v469 = vadd.f32 0.0, %v468
        %470 = vmatprep.mubr.f32.mxu0 0.0
        %471 = vmatmul.mubr.f32.gmra.mrb[0].mxu0 %v333
        %v472 = vpop.f32.mrb[0].mxu0
        %v473 = vadd.f32 0.0, %v472
        %v474 = vpop.f32.mrb[0].mxu0
        %v475 = vadd.f32 0.0, %v474
        %476 = vmatprep.mubr.f32.mxu0 0.0
        %477 = vmatmul.mubr.f32.gmra.mrb[0].mxu0 %v334
        %v478 = vpop.f32.mrb[0].mxu0
        %v479 = vadd.f32 0.0, %v478
        %v480 = vpop.f32.mrb[0].mxu0
        %v481 = vadd.f32 0.0, %v480
        %482 = vmatprep.mubr.f32.mxu0 0.0
        %483 = vmatmul.mubr.f32.gmra.mrb[0].mxu0 %v335
        %v484 = vpop.f32.mrb[0].mxu0
        %v485 = vadd.f32 0.0, %v484
        %v486 = vpop.f32.mrb[0].mxu0
        %v487 = vadd.f32 0.0, %v486
        %488 = vmatprep.mubr.f32.mxu0 0.0
        %489 = vmatmul.mubr.f32.gmra.mrb[0].mxu0 %v336
        %v490 = vpop.f32.mrb[0].mxu0
        %v491 = vadd.f32 0.0, %v490
        %v492 = vpop.f32.mrb[0].mxu0
        %v493 = vadd.f32 0.0, %v492
        %494 = vmatprep.mubr.f32.mxu0 0.0
        %495 = vmatmul.mubr.f32.gmra.mrb[0].mxu0 %v337
        %v496 = vpop.f32.mrb[0].mxu0
        %v497 = vadd.f32 0.0, %v496
        %v498 = vpop.f32.mrb[0].mxu0
        %v499 = vadd.f32 0.0, %v498
        %500 = vmatprep.mubr.f32.mxu0 0.0
        %501 = vmatmul.mubr.f32.gmra.mrb[0].mxu0 %v338
        %v502 = vpop.f32.mrb[0].mxu0
        %v503 = vadd.f32 0.0, %v502
        %v504 = vpop.f32.mrb[0].mxu0
        %v505 = vadd.f32 0.0, %v504
        %506 = vmatprep.mubr.f32.mxu0 0.0
        %507 = vmatmul.mubr.f32.gmra.mrb[0].mxu0 %v339
        %v508 = vpop.f32.mrb[0].mxu0
        %v509 = vadd.f32 0.0, %v508
        %v510 = vpop.f32.mrb[0].mxu0
        %v511 = vadd.f32 0.0, %v510
        %512 = vmatprep.mubr.f32.mxu0 0.0
        %513 = vmatmul.mubr.f32.gmra.mrb[0].mxu0 %v340
        %v514 = vpop.f32.mrb[0].mxu0
        %v515 = vadd.f32 0.0, %v514
        %v516 = vpop.f32.mrb[0].mxu0
        %v517 = vadd.f32 0.0, %v516
        %518 = vmatprep.mubr.f32.mxu0 0.0
        %519 = vmatmul.mubr.f32.gmra.mrb[0].mxu0 %v341
        %v520 = vpop.f32.mrb[0].mxu0
        %v521 = vadd.f32 0.0, %v520
        %v522 = vpop.f32.mrb[0].mxu0
        %v523 = vadd.f32 0.0, %v522
        %524 = vmatprep.mubr.f32.mxu0 0.0
        %525 = vmatmul.mubr.f32.gmra.mrb[0].mxu0 %v342
        %v526 = vpop.f32.mrb[0].mxu0
        %v527 = vadd.f32 0.0, %v526
        %v528 = vpop.f32.mrb[0].mxu0
        %v529 = vadd.f32 0.0, %v528
        %530 = vmatprep.mubr.f32.mxu0 0.0
        %531 = vmatmul.mubr.f32.gmra.mrb[0].mxu0 %v343
        %v532 = vpop.f32.mrb[0].mxu0
        %v533 = vadd.f32 0.0, %v532
        %v534 = vpop.f32.mrb[0].mxu0
        %v535 = vadd.f32 0.0, %v534
        %536 = vdwg.mxu0
        %s537 = smul.u32 %s30, 256
        %s538 = sshra.s32 %s537, 7
        %s539 = sand.u32 %s537, 127
        %s540 = smul.addr %s538, 8
        %s541 = scalar_lea.vmem [#allocation2], %s540
        %542 = vst [vmem:[%s541] sm:$0xff] %v443
        %543 = vst [vmem:[%s541 + $0x8] sm:$0xff] %v445
        %544 = vst [vmem:[%s541 + $0x10] sm:$0xff] %v449
        %545 = vst [vmem:[%s541 + $0x18] sm:$0xff] %v451
        %546 = vst [vmem:[%s541 + $0x20] sm:$0xff] %v455
        %547 = vst [vmem:[%s541 + $0x28] sm:$0xff] %v457
        %548 = vst [vmem:[%s541 + $0x30] sm:$0xff] %v461
        %549 = vst [vmem:[%s541 + $0x38] sm:$0xff] %v463
        %550 = vst [vmem:[%s541 + $0x40] sm:$0xff] %v467
        %551 = vst [vmem:[%s541 + $0x48] sm:$0xff] %v469
        %552 = vst [vmem:[%s541 + $0x50] sm:$0xff] %v473
        %553 = vst [vmem:[%s541 + $0x58] sm:$0xff] %v475
        %554 = vst [vmem:[%s541 + $0x60] sm:$0xff] %v479
        %555 = vst [vmem:[%s541 + $0x68] sm:$0xff] %v481
        %556 = vst [vmem:[%s541 + $0x70] sm:$0xff] %v485
        %557 = vst [vmem:[%s541 + $0x78] sm:$0xff] %v487
        %558 = vst [vmem:[%s541 + $0x80] sm:$0xff] %v491
        %559 = vst [vmem:[%s541 + $0x88] sm:$0xff] %v493
        %560 = vst [vmem:[%s541 + $0x90] sm:$0xff] %v497
        %561 = vst [vmem:[%s541 + $0x98] sm:$0xff] %v499
        %562 = vst [vmem:[%s541 + $0xa0] sm:$0xff] %v503
        %563 = vst [vmem:[%s541 + $0xa8] sm:$0xff] %v505
        %564 = vst [vmem:[%s541 + $0xb0] sm:$0xff] %v509
        %565 = vst [vmem:[%s541 + $0xb8] sm:$0xff] %v511
        %566 = vst [vmem:[%s541 + $0xc0] sm:$0xff] %v515
        %567 = vst [vmem:[%s541 + $0xc8] sm:$0xff] %v517
        %568 = vst [vmem:[%s541 + $0xd0] sm:$0xff] %v521
        %569 = vst [vmem:[%s541 + $0xd8] sm:$0xff] %v523
        %570 = vst [vmem:[%s541 + $0xe0] sm:$0xff] %v527
        %571 = vst [vmem:[%s541 + $0xe8] sm:$0xff] %v529
        %572 = vst [vmem:[%s541 + $0xf0] sm:$0xff] %v533
        %573 = vst [vmem:[%s541 + $0xf8] sm:$0xff] %v535
        %p574 = scmp.eq.s32.totalorder %s30, 0
        // Predicated region
        $region41: #{tpu_custom_call.1} parent=35 // pred_check
          %p575 = pneg %p574
        $region42: #{tpu_custom_call.1} parent=35 // pred_check_branch
          %577 = sbr.rel (%p575) target = $region44
        $region43: #{tpu_custom_call.1} parent=35 // pred_region
          %v578 = vld [vmem:[#allocation2] sm:$0xff]
          %v579 = vld [vmem:[#allocation2 + $0x8] sm:$0xff]
          %v580 = vld [vmem:[#allocation2 + $0x10] sm:$0xff]
          %v581 = vld [vmem:[#allocation2 + $0x18] sm:$0xff]
          %v582 = vld [vmem:[#allocation2 + $0x20] sm:$0xff]
          %v583 = vld [vmem:[#allocation2 + $0x28] sm:$0xff]
          %v584 = vld [vmem:[#allocation2 + $0x30] sm:$0xff]
          %v585 = vld [vmem:[#allocation2 + $0x38] sm:$0xff]
          %v586 = vld [vmem:[#allocation2 + $0x40] sm:$0xff]
          %v587 = vld [vmem:[#allocation2 + $0x48] sm:$0xff]
          %v588 = vld [vmem:[#allocation2 + $0x50] sm:$0xff]
          %v589 = vld [vmem:[#allocation2 + $0x58] sm:$0xff]
          %v590 = vld [vmem:[#allocation2 + $0x60] sm:$0xff]
          %v591 = vld [vmem:[#allocation2 + $0x68] sm:$0xff]
          %v592 = vld [vmem:[#allocation2 + $0x70] sm:$0xff]
          %v593 = vld [vmem:[#allocation2 + $0x78] sm:$0xff]
          %v594 = vld [vmem:[#allocation2 + $0x80] sm:$0xff]
          %v595 = vld [vmem:[#allocation2 + $0x88] sm:$0xff]
          %v596 = vld [vmem:[#allocation2 + $0x90] sm:$0xff]
          %v597 = vld [vmem:[#allocation2 + $0x98] sm:$0xff]
          %v598 = vld [vmem:[#allocation2 + $0xa0] sm:$0xff]
          %v599 = vld [vmem:[#allocation2 + $0xa8] sm:$0xff]
          %v600 = vld [vmem:[#allocation2 + $0xb0] sm:$0xff]
          %v601 = vld [vmem:[#allocation2 + $0xb8] sm:$0xff]
          %v602 = vld [vmem:[#allocation2 + $0xc0] sm:$0xff]
          %v603 = vld [vmem:[#allocation2 + $0xc8] sm:$0xff]
          %v604 = vld [vmem:[#allocation2 + $0xd0] sm:$0xff]
          %v605 = vld [vmem:[#allocation2 + $0xd8] sm:$0xff]
          %v606 = vld [vmem:[#allocation2 + $0xe0] sm:$0xff]
          %v607 = vld [vmem:[#allocation2 + $0xe8] sm:$0xff]
          %v608 = vld [vmem:[#allocation2 + $0xf0] sm:$0xff]
          %v609 = vld [vmem:[#allocation2 + $0xf8] sm:$0xff]
          %v610 = vld [vmem:[%s2] sm:$0x3]
          %v611 = vld [vmem:[%s326] sm:$0xff]
          %v612 = vld [vmem:[%s326 + $0x8] sm:$0xff]
          %v613 = vld [vmem:[%s326 + $0x10] sm:$0xff]
          %v614 = vld [vmem:[%s326 + $0x18] sm:$0xff]
          %v615 = vld [vmem:[%s326 + $0x20] sm:$0xff]
          %v616 = vld [vmem:[%s326 + $0x28] sm:$0xff]
          %v617 = vld [vmem:[%s326 + $0x30] sm:$0xff]
          %v618 = vld [vmem:[%s326 + $0x38] sm:$0xff]
          %v619 = vld [vmem:[%s326 + $0x40] sm:$0xff]
          %v620 = vld [vmem:[%s326 + $0x48] sm:$0xff]
          %v621 = vld [vmem:[%s326 + $0x50] sm:$0xff]
          %v622 = vld [vmem:[%s326 + $0x58] sm:$0xff]
          %v623 = vld [vmem:[%s326 + $0x60] sm:$0xff]
          %v624 = vld [vmem:[%s326 + $0x68] sm:$0xff]
          %v625 = vld [vmem:[%s326 + $0x70] sm:$0xff]
          %v626 = vld [vmem:[%s326 + $0x78] sm:$0xff]
          %627 = vset.pattern.permute.xlu0 0
          %628 = vperm.xlu0 %627, %v611
          %v629 = vpop.permute.xlu0 %628
          %630 = vset.pattern.permute.xlu0 0
          %631 = vperm.xlu0 %630, %v612
          %v632 = vpop.permute.xlu0 %631
          %633 = vset.pattern.permute.xlu0 0
          %634 = vperm.xlu0 %633, %v613
          %v635 = vpop.permute.xlu0 %634
          %636 = vset.pattern.permute.xlu0 0
          %637 = vperm.xlu0 %636, %v614
          %v638 = vpop.permute.xlu0 %637
          %639 = vset.pattern.permute.xlu0 0
          %640 = vperm.xlu0 %639, %v615
          %v641 = vpop.permute.xlu0 %640
          %642 = vset.pattern.permute.xlu0 0
          %643 = vperm.xlu0 %642, %v616
          %v644 = vpop.permute.xlu0 %643
          %645 = vset.pattern.permute.xlu0 0
          %646 = vperm.xlu0 %645, %v617
          %v647 = vpop.permute.xlu0 %646
          %648 = vset.pattern.permute.xlu0 0
          %649 = vperm.xlu0 %648, %v618
          %v650 = vpop.permute.xlu0 %649
          %651 = vset.pattern.permute.xlu0 0
          %652 = vperm.xlu0 %651, %v619
          %v653 = vpop.permute.xlu0 %652
          %654 = vset.pattern.permute.xlu0 0
          %655 = vperm.xlu0 %654, %v620
          %v656 = vpop.permute.xlu0 %655
          %657 = vset.pattern.permute.xlu0 0
          %658 = vperm.xlu0 %657, %v621
          %v659 = vpop.permute.xlu0 %658
          %660 = vset.pattern.permute.xlu0 0
          %661 = vperm.xlu0 %660, %v622
          %v662 = vpop.permute.xlu0 %661
          %663 = vset.pattern.permute.xlu0 0
          %664 = vperm.xlu0 %663, %v623
          %v665 = vpop.permute.xlu0 %664
          %666 = vset.pattern.permute.xlu0 0
          %667 = vperm.xlu0 %666, %v624
          %v668 = vpop.permute.xlu0 %667
          %669 = vset.pattern.permute.xlu0 0
          %670 = vperm.xlu0 %669, %v625
          %v671 = vpop.permute.xlu0 %670
          %672 = vset.pattern.permute.xlu0 0
          %673 = vperm.xlu0 %672, %v626
          %v674 = vpop.permute.xlu0 %673
          %v675 = vlaneseq
          %v676 = vshrl.u32 %v675, 7
          %v677 = vsub.s32 0, %v676
          %v678 = vrot.slane %v610, %v677
          %v679 = vlaneseq
          %v680 = vshrl.u32 %v679, 7
          %v681 = vsub.s32 1, %v680
          %v682 = vrot.slane %v610, %v681
          %vm683 = vcmp.eq.s32.totalorder %v629, %v678
          %vm684 = vcmp.eq.s32.totalorder %v629, %v682
          %vm685 = vcmp.eq.s32.totalorder %v632, %v678
          %vm686 = vcmp.eq.s32.totalorder %v632, %v682
          %vm687 = vcmp.eq.s32.totalorder %v635, %v678
          %vm688 = vcmp.eq.s32.totalorder %v635, %v682
          %vm689 = vcmp.eq.s32.totalorder %v638, %v678
          %vm690 = vcmp.eq.s32.totalorder %v638, %v682
          %vm691 = vcmp.eq.s32.totalorder %v641, %v678
          %vm692 = vcmp.eq.s32.totalorder %v641, %v682
          %vm693 = vcmp.eq.s32.totalorder %v644, %v678
          %vm694 = vcmp.eq.s32.totalorder %v644, %v682
          %vm695 = vcmp.eq.s32.totalorder %v647, %v678
          %vm696 = vcmp.eq.s32.totalorder %v647, %v682
          %vm697 = vcmp.eq.s32.totalorder %v650, %v678
          %vm698 = vcmp.eq.s32.totalorder %v650, %v682
          %vm699 = vcmp.eq.s32.totalorder %v653, %v678
          %vm700 = vcmp.eq.s32.totalorder %v653, %v682
          %vm701 = vcmp.eq.s32.totalorder %v656, %v678
          %vm702 = vcmp.eq.s32.totalorder %v656, %v682
          %vm703 = vcmp.eq.s32.totalorder %v659, %v678
          %vm704 = vcmp.eq.s32.totalorder %v659, %v682
          %vm705 = vcmp.eq.s32.totalorder %v662, %v678
          %vm706 = vcmp.eq.s32.totalorder %v662, %v682
          %vm707 = vcmp.eq.s32.totalorder %v665, %v678
          %vm708 = vcmp.eq.s32.totalorder %v665, %v682
          %vm709 = vcmp.eq.s32.totalorder %v668, %v678
          %vm710 = vcmp.eq.s32.totalorder %v668, %v682
          %vm711 = vcmp.eq.s32.totalorder %v671, %v678
          %vm712 = vcmp.eq.s32.totalorder %v671, %v682
          %vm713 = vcmp.eq.s32.totalorder %v674, %v678
          %vm714 = vcmp.eq.s32.totalorder %v674, %v682
          %vm715 = vmxor %vm683, 1
          %vm716 = vmxor %vm684, 1
          %vm717 = vmxor %vm685, 1
          %vm718 = vmxor %vm686, 1
          %vm719 = vmxor %vm687, 1
          %vm720 = vmxor %vm688, 1
          %vm721 = vmxor %vm689, 1
          %vm722 = vmxor %vm690, 1
          %vm723 = vmxor %vm691, 1
          %vm724 = vmxor %vm692, 1
          %vm725 = vmxor %vm693, 1
          %vm726 = vmxor %vm694, 1
          %vm727 = vmxor %vm695, 1
          %vm728 = vmxor %vm696, 1
          %vm729 = vmxor %vm697, 1
          %vm730 = vmxor %vm698, 1
          %vm731 = vmxor %vm699, 1
          %vm732 = vmxor %vm700, 1
          %vm733 = vmxor %vm701, 1
          %vm734 = vmxor %vm702, 1
          %vm735 = vmxor %vm703, 1
          %vm736 = vmxor %vm704, 1
          %vm737 = vmxor %vm705, 1
          %vm738 = vmxor %vm706, 1
          %vm739 = vmxor %vm707, 1
          %vm740 = vmxor %vm708, 1
          %vm741 = vmxor %vm709, 1
          %vm742 = vmxor %vm710, 1
          %vm743 = vmxor %vm711, 1
          %vm744 = vmxor %vm712, 1
          %vm745 = vmxor %vm713, 1
          %vm746 = vmxor %vm714, 1
          %vm747 = vcmp.lt.f32.partialorder %v578, 0.9
          %vm748 = vcmp.lt.f32.partialorder %v579, 0.9
          %vm749 = vcmp.lt.f32.partialorder %v580, 0.9
          %vm750 = vcmp.lt.f32.partialorder %v581, 0.9
          %vm751 = vcmp.lt.f32.partialorder %v582, 0.9
          %vm752 = vcmp.lt.f32.partialorder %v583, 0.9
          %vm753 = vcmp.lt.f32.partialorder %v584, 0.9
          %vm754 = vcmp.lt.f32.partialorder %v585, 0.9
          %vm755 = vcmp.lt.f32.partialorder %v586, 0.9
          %vm756 = vcmp.lt.f32.partialorder %v587, 0.9
          %vm757 = vcmp.lt.f32.partialorder %v588, 0.9
          %vm758 = vcmp.lt.f32.partialorder %v589, 0.9
          %vm759 = vcmp.lt.f32.partialorder %v590, 0.9
          %vm760 = vcmp.lt.f32.partialorder %v591, 0.9
          %vm761 = vcmp.lt.f32.partialorder %v592, 0.9
          %vm762 = vcmp.lt.f32.partialorder %v593, 0.9
          %vm763 = vcmp.lt.f32.partialorder %v594, 0.9
          %vm764 = vcmp.lt.f32.partialorder %v595, 0.9
          %vm765 = vcmp.lt.f32.partialorder %v596, 0.9
          %vm766 = vcmp.lt.f32.partialorder %v597, 0.9
          %vm767 = vcmp.lt.f32.partialorder %v598, 0.9
          %vm768 = vcmp.lt.f32.partialorder %v599, 0.9
          %vm769 = vcmp.lt.f32.partialorder %v600, 0.9
          %vm770 = vcmp.lt.f32.partialorder %v601, 0.9
          %vm771 = vcmp.lt.f32.partialorder %v602, 0.9
          %vm772 = vcmp.lt.f32.partialorder %v603, 0.9
          %vm773 = vcmp.lt.f32.partialorder %v604, 0.9
          %vm774 = vcmp.lt.f32.partialorder %v605, 0.9
          %vm775 = vcmp.lt.f32.partialorder %v606, 0.9
          %vm776 = vcmp.lt.f32.partialorder %v607, 0.9
          %vm777 = vcmp.lt.f32.partialorder %v608, 0.9
          %vm778 = vcmp.lt.f32.partialorder %v609, 0.9
          %vm779 = vmand %vm683, %vm747
          %vm780 = vmand %vm684, %vm748
          %vm781 = vmand %vm685, %vm749
          %vm782 = vmand %vm686, %vm750
          %vm783 = vmand %vm687, %vm751
          %vm784 = vmand %vm688, %vm752
          %vm785 = vmand %vm689, %vm753
          %vm786 = vmand %vm690, %vm754
          %vm787 = vmand %vm691, %vm755
          %vm788 = vmand %vm692, %vm756
          %vm789 = vmand %vm693, %vm757
          %vm790 = vmand %vm694, %vm758
          %vm791 = vmand %vm695, %vm759
          %vm792 = vmand %vm696, %vm760
          %vm793 = vmand %vm697, %vm761
          %vm794 = vmand %vm698, %vm762
          %vm795 = vmand %vm699, %vm763
          %vm796 = vmand %vm700, %vm764
          %vm797 = vmand %vm701, %vm765
          %vm798 = vmand %vm702, %vm766
          %vm799 = vmand %vm703, %vm767
          %vm800 = vmand %vm704, %vm768
          %vm801 = vmand %vm705, %vm769
          %vm802 = vmand %vm706, %vm770
          %vm803 = vmand %vm707, %vm771
          %vm804 = vmand %vm708, %vm772
          %vm805 = vmand %vm709, %vm773
          %vm806 = vmand %vm710, %vm774
          %vm807 = vmand %vm711, %vm775
          %vm808 = vmand %vm712, %vm776
          %vm809 = vmand %vm713, %vm777
          %vm810 = vmand %vm714, %vm778
          %v811 = vsel %vm779, 1, 0
          %v812 = vsel %vm780, 1, 0
          %v813 = vsel %vm781, 1, 0
          %v814 = vsel %vm782, 1, 0
          %v815 = vsel %vm783, 1, 0
          %v816 = vsel %vm784, 1, 0
          %v817 = vsel %vm785, 1, 0
          %v818 = vsel %vm786, 1, 0
          %v819 = vsel %vm787, 1, 0
          %v820 = vsel %vm788, 1, 0
          %v821 = vsel %vm789, 1, 0
          %v822 = vsel %vm790, 1, 0
          %v823 = vsel %vm791, 1, 0
          %v824 = vsel %vm792, 1, 0
          %v825 = vsel %vm793, 1, 0
          %v826 = vsel %vm794, 1, 0
          %v827 = vsel %vm795, 1, 0
          %v828 = vsel %vm796, 1, 0
          %v829 = vsel %vm797, 1, 0
          %v830 = vsel %vm798, 1, 0
          %v831 = vsel %vm799, 1, 0
          %v832 = vsel %vm800, 1, 0
          %v833 = vsel %vm801, 1, 0
          %v834 = vsel %vm802, 1, 0
          %v835 = vsel %vm803, 1, 0
          %v836 = vsel %vm804, 1, 0
          %v837 = vsel %vm805, 1, 0
          %v838 = vsel %vm806, 1, 0
          %v839 = vsel %vm807, 1, 0
          %v840 = vsel %vm808, 1, 0
          %v841 = vsel %vm809, 1, 0
          %v842 = vsel %vm810, 1, 0
          %v843 = vcvt.s32.f32 %v811
          %v844 = vcvt.s32.f32 %v812
          %v845 = vcvt.s32.f32 %v813
          %v846 = vcvt.s32.f32 %v814
          %v847 = vcvt.s32.f32 %v815
          %v848 = vcvt.s32.f32 %v816
          %v849 = vcvt.s32.f32 %v817
          %v850 = vcvt.s32.f32 %v818
          %v851 = vcvt.s32.f32 %v819
          %v852 = vcvt.s32.f32 %v820
          %v853 = vcvt.s32.f32 %v821
          %v854 = vcvt.s32.f32 %v822
          %v855 = vcvt.s32.f32 %v823
          %v856 = vcvt.s32.f32 %v824
          %v857 = vcvt.s32.f32 %v825
          %v858 = vcvt.s32.f32 %v826
          %v859 = vcvt.s32.f32 %v827
          %v860 = vcvt.s32.f32 %v828
          %v861 = vcvt.s32.f32 %v829
          %v862 = vcvt.s32.f32 %v830
          %v863 = vcvt.s32.f32 %v831
          %v864 = vcvt.s32.f32 %v832
          %v865 = vcvt.s32.f32 %v833
          %v866 = vcvt.s32.f32 %v834
          %v867 = vcvt.s32.f32 %v835
          %v868 = vcvt.s32.f32 %v836
          %v869 = vcvt.s32.f32 %v837
          %v870 = vcvt.s32.f32 %v838
          %v871 = vcvt.s32.f32 %v839
          %v872 = vcvt.s32.f32 %v840
          %v873 = vcvt.s32.f32 %v841
          %v874 = vcvt.s32.f32 %v842
          %v875 = vadd.f32 %v843, %v844
          %876 = vadd.xlane.f32.xlu0 %v875
          %v877 = vpop.xlane.xlu0 %876
          %v878 = vadd.f32 %v845, %v846
          %879 = vadd.xlane.f32.xlu0 %v878
          %v880 = vpop.xlane.xlu0 %879
          %v881 = vadd.f32 %v847, %v848
          %882 = vadd.xlane.f32.xlu0 %v881
          %v883 = vpop.xlane.xlu0 %882
          %v884 = vadd.f32 %v849, %v850
          %885 = vadd.xlane.f32.xlu0 %v884
          %v886 = vpop.xlane.xlu0 %885
          %v887 = vadd.f32 %v851, %v852
          %888 = vadd.xlane.f32.xlu0 %v887
          %v889 = vpop.xlane.xlu0 %888
          %v890 = vadd.f32 %v853, %v854
          %891 = vadd.xlane.f32.xlu0 %v890
          %v892 = vpop.xlane.xlu0 %891
          %v893 = vadd.f32 %v855, %v856
          %894 = vadd.xlane.f32.xlu0 %v893
          %v895 = vpop.xlane.xlu0 %894
          %v896 = vadd.f32 %v857, %v858
          %897 = vadd.xlane.f32.xlu0 %v896
          %v898 = vpop.xlane.xlu0 %897
          %v899 = vadd.f32 %v859, %v860
          %900 = vadd.xlane.f32.xlu0 %v899
          %v901 = vpop.xlane.xlu0 %900
          %v902 = vadd.f32 %v861, %v862
          %903 = vadd.xlane.f32.xlu0 %v902
          %v904 = vpop.xlane.xlu0 %903
          %v905 = vadd.f32 %v863, %v864
          %906 = vadd.xlane.f32.xlu0 %v905
          %v907 = vpop.xlane.xlu0 %906
          %v908 = vadd.f32 %v865, %v866
          %909 = vadd.xlane.f32.xlu0 %v908
          %v910 = vpop.xlane.xlu0 %909
          %v911 = vadd.f32 %v867, %v868
          %912 = vadd.xlane.f32.xlu0 %v911
          %v913 = vpop.xlane.xlu0 %912
          %v914 = vadd.f32 %v869, %v870
          %915 = vadd.xlane.f32.xlu0 %v914
          %v916 = vpop.xlane.xlu0 %915
          %v917 = vadd.f32 %v871, %v872
          %918 = vadd.xlane.f32.xlu0 %v917
          %v919 = vpop.xlane.xlu0 %918
          %v920 = vadd.f32 %v873, %v874
          %921 = vadd.xlane.f32.xlu0 %v920
          %v922 = vpop.xlane.xlu0 %921
          %v923 = vsel %vm779, %v578, inf
          %v924 = vsel %vm780, %v579, inf
          %v925 = vsel %vm781, %v580, inf
          %v926 = vsel %vm782, %v581, inf
          %v927 = vsel %vm783, %v582, inf
          %v928 = vsel %vm784, %v583, inf
          %v929 = vsel %vm785, %v584, inf
          %v930 = vsel %vm786, %v585, inf
          %v931 = vsel %vm787, %v586, inf
          %v932 = vsel %vm788, %v587, inf
          %v933 = vsel %vm789, %v588, inf
          %v934 = vsel %vm790, %v589, inf
          %v935 = vsel %vm791, %v590, inf
          %v936 = vsel %vm792, %v591, inf
          %v937 = vsel %vm793, %v592, inf
          %v938 = vsel %vm794, %v593, inf
          %v939 = vsel %vm795, %v594, inf
          %v940 = vsel %vm796, %v595, inf
          %v941 = vsel %vm797, %v596, inf
          %v942 = vsel %vm798, %v597, inf
          %v943 = vsel %vm799, %v598, inf
          %v944 = vsel %vm800, %v599, inf
          %v945 = vsel %vm801, %v600, inf
          %v946 = vsel %vm802, %v601, inf
          %v947 = vsel %vm803, %v602, inf
          %v948 = vsel %vm804, %v603, inf
          %v949 = vsel %vm805, %v604, inf
          %v950 = vsel %vm806, %v605, inf
          %v951 = vsel %vm807, %v606, inf
          %v952 = vsel %vm808, %v607, inf
          %v953 = vsel %vm809, %v608, inf
          %v954 = vsel %vm810, %v609, inf
          %v955 = vmin.f32 %v923, %v924
          %956 = vmin.xlane.f32.xlu0 %v955
          %v957 = vpop.xlane.xlu0 %956
          %v958 = vmin.f32 %v925, %v926
          %959 = vmin.xlane.f32.xlu0 %v958
          %v960 = vpop.xlane.xlu0 %959
          %v961 = vmin.f32 %v927, %v928
          %962 = vmin.xlane.f32.xlu0 %v961
          %v963 = vpop.xlane.xlu0 %962
          %v964 = vmin.f32 %v929, %v930
          %965 = vmin.xlane.f32.xlu0 %v964
          %v966 = vpop.xlane.xlu0 %965
          %v967 = vmin.f32 %v931, %v932
          %968 = vmin.xlane.f32.xlu0 %v967
          %v969 = vpop.xlane.xlu0 %968
          %v970 = vmin.f32 %v933, %v934
          %971 = vmin.xlane.f32.xlu0 %v970
          %v972 = vpop.xlane.xlu0 %971
          %v973 = vmin.f32 %v935, %v936
          %974 = vmin.xlane.f32.xlu0 %v973
          %v975 = vpop.xlane.xlu0 %974
          %v976 = vmin.f32 %v937, %v938
          %977 = vmin.xlane.f32.xlu0 %v976
          %v978 = vpop.xlane.xlu0 %977
          %v979 = vmin.f32 %v939, %v940
          %980 = vmin.xlane.f32.xlu0 %v979
          %v981 = vpop.xlane.xlu0 %980
          %v982 = vmin.f32 %v941, %v942
          %983 = vmin.xlane.f32.xlu0 %v982
          %v984 = vpop.xlane.xlu0 %983
          %v985 = vmin.f32 %v943, %v944
          %986 = vmin.xlane.f32.xlu0 %v985
          %v987 = vpop.xlane.xlu0 %986
          %v988 = vmin.f32 %v945, %v946
          %989 = vmin.xlane.f32.xlu0 %v988
          %v990 = vpop.xlane.xlu0 %989
          %v991 = vmin.f32 %v947, %v948
          %992 = vmin.xlane.f32.xlu0 %v991
          %v993 = vpop.xlane.xlu0 %992
          %v994 = vmin.f32 %v949, %v950
          %995 = vmin.xlane.f32.xlu0 %v994
          %v996 = vpop.xlane.xlu0 %995
          %v997 = vmin.f32 %v951, %v952
          %998 = vmin.xlane.f32.xlu0 %v997
          %v999 = vpop.xlane.xlu0 %998
          %v1000 = vmin.f32 %v953, %v954
          %1001 = vmin.xlane.f32.xlu0 %v1000
          %v1002 = vpop.xlane.xlu0 %1001
          %v1003 = vadd.f32 %v578, 0.5
          %v1004 = vadd.f32 %v579, 0.5
          %v1005 = vadd.f32 %v580, 0.5
          %v1006 = vadd.f32 %v581, 0.5
          %v1007 = vadd.f32 %v582, 0.5
          %v1008 = vadd.f32 %v583, 0.5
          %v1009 = vadd.f32 %v584, 0.5
          %v1010 = vadd.f32 %v585, 0.5
          %v1011 = vadd.f32 %v586, 0.5
          %v1012 = vadd.f32 %v587, 0.5
          %v1013 = vadd.f32 %v588, 0.5
          %v1014 = vadd.f32 %v589, 0.5
          %v1015 = vadd.f32 %v590, 0.5
          %v1016 = vadd.f32 %v591, 0.5
          %v1017 = vadd.f32 %v592, 0.5
          %v1018 = vadd.f32 %v593, 0.5
          %v1019 = vadd.f32 %v594, 0.5
          %v1020 = vadd.f32 %v595, 0.5
          %v1021 = vadd.f32 %v596, 0.5
          %v1022 = vadd.f32 %v597, 0.5
          %v1023 = vadd.f32 %v598, 0.5
          %v1024 = vadd.f32 %v599, 0.5
          %v1025 = vadd.f32 %v600, 0.5
          %v1026 = vadd.f32 %v601, 0.5
          %v1027 = vadd.f32 %v602, 0.5
          %v1028 = vadd.f32 %v603, 0.5
          %v1029 = vadd.f32 %v604, 0.5
          %v1030 = vadd.f32 %v605, 0.5
          %v1031 = vadd.f32 %v606, 0.5
          %v1032 = vadd.f32 %v607, 0.5
          %v1033 = vadd.f32 %v608, 0.5
          %v1034 = vadd.f32 %v609, 0.5
          %vm1035 = vcmp.gt.f32.partialorder %v1003, %v957
          %vm1036 = vcmp.gt.f32.partialorder %v1004, %v957
          %vm1037 = vcmp.gt.f32.partialorder %v1005, %v960
          %vm1038 = vcmp.gt.f32.partialorder %v1006, %v960
          %vm1039 = vcmp.gt.f32.partialorder %v1007, %v963
          %vm1040 = vcmp.gt.f32.partialorder %v1008, %v963
          %vm1041 = vcmp.gt.f32.partialorder %v1009, %v966
          %vm1042 = vcmp.gt.f32.partialorder %v1010, %v966
          %vm1043 = vcmp.gt.f32.partialorder %v1011, %v969
          %vm1044 = vcmp.gt.f32.partialorder %v1012, %v969
          %vm1045 = vcmp.gt.f32.partialorder %v1013, %v972
          %vm1046 = vcmp.gt.f32.partialorder %v1014, %v972
          %vm1047 = vcmp.gt.f32.partialorder %v1015, %v975
          %vm1048 = vcmp.gt.f32.partialorder %v1016, %v975
          %vm1049 = vcmp.gt.f32.partialorder %v1017, %v978
          %vm1050 = vcmp.gt.f32.partialorder %v1018, %v978
          %vm1051 = vcmp.gt.f32.partialorder %v1019, %v981
          %vm1052 = vcmp.gt.f32.partialorder %v1020, %v981
          %vm1053 = vcmp.gt.f32.partialorder %v1021, %v984
          %vm1054 = vcmp.gt.f32.partialorder %v1022, %v984
          %vm1055 = vcmp.gt.f32.partialorder %v1023, %v987
          %vm1056 = vcmp.gt.f32.partialorder %v1024, %v987
          %vm1057 = vcmp.gt.f32.partialorder %v1025, %v990
          %vm1058 = vcmp.gt.f32.partialorder %v1026, %v990
          %vm1059 = vcmp.gt.f32.partialorder %v1027, %v993
          %vm1060 = vcmp.gt.f32.partialorder %v1028, %v993
          %vm1061 = vcmp.gt.f32.partialorder %v1029, %v996
          %vm1062 = vcmp.gt.f32.partialorder %v1030, %v996
          %vm1063 = vcmp.gt.f32.partialorder %v1031, %v999
          %vm1064 = vcmp.gt.f32.partialorder %v1032, %v999
          %vm1065 = vcmp.gt.f32.partialorder %v1033, %v1002
          %vm1066 = vcmp.gt.f32.partialorder %v1034, %v1002
          %vm1067 = vcmp.gt.f32.partialorder %v578, 0.1
          %vm1068 = vcmp.gt.f32.partialorder %v579, 0.1
          %vm1069 = vcmp.gt.f32.partialorder %v580, 0.1
          %vm1070 = vcmp.gt.f32.partialorder %v581, 0.1
          %vm1071 = vcmp.gt.f32.partialorder %v582, 0.1
          %vm1072 = vcmp.gt.f32.partialorder %v583, 0.1
          %vm1073 = vcmp.gt.f32.partialorder %v584, 0.1
          %vm1074 = vcmp.gt.f32.partialorder %v585, 0.1
          %vm1075 = vcmp.gt.f32.partialorder %v586, 0.1
          %vm1076 = vcmp.gt.f32.partialorder %v587, 0.1
          %vm1077 = vcmp.gt.f32.partialorder %v588, 0.1
          %vm1078 = vcmp.gt.f32.partialorder %v589, 0.1
          %vm1079 = vcmp.gt.f32.partialorder %v590, 0.1
          %vm1080 = vcmp.gt.f32.partialorder %v591, 0.1
          %vm1081 = vcmp.gt.f32.partialorder %v592, 0.1
          %vm1082 = vcmp.gt.f32.partialorder %v593, 0.1
          %vm1083 = vcmp.gt.f32.partialorder %v594, 0.1
          %vm1084 = vcmp.gt.f32.partialorder %v595, 0.1
          %vm1085 = vcmp.gt.f32.partialorder %v596, 0.1
          %vm1086 = vcmp.gt.f32.partialorder %v597, 0.1
          %vm1087 = vcmp.gt.f32.partialorder %v598, 0.1
          %vm1088 = vcmp.gt.f32.partialorder %v599, 0.1
          %vm1089 = vcmp.gt.f32.partialorder %v600, 0.1
          %vm1090 = vcmp.gt.f32.partialorder %v601, 0.1
          %vm1091 = vcmp.gt.f32.partialorder %v602, 0.1
          %vm1092 = vcmp.gt.f32.partialorder %v603, 0.1
          %vm1093 = vcmp.gt.f32.partialorder %v604, 0.1
          %vm1094 = vcmp.gt.f32.partialorder %v605, 0.1
          %vm1095 = vcmp.gt.f32.partialorder %v606, 0.1
          %vm1096 = vcmp.gt.f32.partialorder %v607, 0.1
          %vm1097 = vcmp.gt.f32.partialorder %v608, 0.1
          %vm1098 = vcmp.gt.f32.partialorder %v609, 0.1
          %vm1099 = vmand %vm1035, %vm1067
          %vm1100 = vmand %vm1036, %vm1068
          %vm1101 = vmand %vm1037, %vm1069
          %vm1102 = vmand %vm1038, %vm1070
          %vm1103 = vmand %vm1039, %vm1071
          %vm1104 = vmand %vm1040, %vm1072
          %vm1105 = vmand %vm1041, %vm1073
          %vm1106 = vmand %vm1042, %vm1074
          %vm1107 = vmand %vm1043, %vm1075
          %vm1108 = vmand %vm1044, %vm1076
          %vm1109 = vmand %vm1045, %vm1077
          %vm1110 = vmand %vm1046, %vm1078
          %vm1111 = vmand %vm1047, %vm1079
          %vm1112 = vmand %vm1048, %vm1080
          %vm1113 = vmand %vm1049, %vm1081
          %vm1114 = vmand %vm1050, %vm1082
          %vm1115 = vmand %vm1051, %vm1083
          %vm1116 = vmand %vm1052, %vm1084
          %vm1117 = vmand %vm1053, %vm1085
          %vm1118 = vmand %vm1054, %vm1086
          %vm1119 = vmand %vm1055, %vm1087
          %vm1120 = vmand %vm1056, %vm1088
          %vm1121 = vmand %vm1057, %vm1089
          %vm1122 = vmand %vm1058, %vm1090
          %vm1123 = vmand %vm1059, %vm1091
          %vm1124 = vmand %vm1060, %vm1092
          %vm1125 = vmand %vm1061, %vm1093
          %vm1126 = vmand %vm1062, %vm1094
          %vm1127 = vmand %vm1063, %vm1095
          %vm1128 = vmand %vm1064, %vm1096
          %vm1129 = vmand %vm1065, %vm1097
          %vm1130 = vmand %vm1066, %vm1098
          %vm1131 = vmand %vm715, %vm1099
          %vm1132 = vmand %vm716, %vm1100
          %vm1133 = vmand %vm717, %vm1101
          %vm1134 = vmand %vm718, %vm1102
          %vm1135 = vmand %vm719, %vm1103
          %vm1136 = vmand %vm720, %vm1104
          %vm1137 = vmand %vm721, %vm1105
          %vm1138 = vmand %vm722, %vm1106
          %vm1139 = vmand %vm723, %vm1107
          %vm1140 = vmand %vm724, %vm1108
          %vm1141 = vmand %vm725, %vm1109
          %vm1142 = vmand %vm726, %vm1110
          %vm1143 = vmand %vm727, %vm1111
          %vm1144 = vmand %vm728, %vm1112
          %vm1145 = vmand %vm729, %vm1113
          %vm1146 = vmand %vm730, %vm1114
          %vm1147 = vmand %vm731, %vm1115
          %vm1148 = vmand %vm732, %vm1116
          %vm1149 = vmand %vm733, %vm1117
          %vm1150 = vmand %vm734, %vm1118
          %vm1151 = vmand %vm735, %vm1119
          %vm1152 = vmand %vm736, %vm1120
          %vm1153 = vmand %vm737, %vm1121
          %vm1154 = vmand %vm738, %vm1122
          %vm1155 = vmand %vm739, %vm1123
          %vm1156 = vmand %vm740, %vm1124
          %vm1157 = vmand %vm741, %vm1125
          %vm1158 = vmand %vm742, %vm1126
          %vm1159 = vmand %vm743, %vm1127
          %vm1160 = vmand %vm744, %vm1128
          %vm1161 = vmand %vm745, %vm1129
          %vm1162 = vmand %vm746, %vm1130
          %v1163 = vsel %vm1131, 1, 0
          %v1164 = vsel %vm1132, 1, 0
          %v1165 = vsel %vm1133, 1, 0
          %v1166 = vsel %vm1134, 1, 0
          %v1167 = vsel %vm1135, 1, 0
          %v1168 = vsel %vm1136, 1, 0
          %v1169 = vsel %vm1137, 1, 0
          %v1170 = vsel %vm1138, 1, 0
          %v1171 = vsel %vm1139, 1, 0
          %v1172 = vsel %vm1140, 1, 0
          %v1173 = vsel %vm1141, 1, 0
          %v1174 = vsel %vm1142, 1, 0
          %v1175 = vsel %vm1143, 1, 0
          %v1176 = vsel %vm1144, 1, 0
          %v1177 = vsel %vm1145, 1, 0
          %v1178 = vsel %vm1146, 1, 0
          %v1179 = vsel %vm1147, 1, 0
          %v1180 = vsel %vm1148, 1, 0
          %v1181 = vsel %vm1149, 1, 0
          %v1182 = vsel %vm1150, 1, 0
          %v1183 = vsel %vm1151, 1, 0
          %v1184 = vsel %vm1152, 1, 0
          %v1185 = vsel %vm1153, 1, 0
          %v1186 = vsel %vm1154, 1, 0
          %v1187 = vsel %vm1155, 1, 0
          %v1188 = vsel %vm1156, 1, 0
          %v1189 = vsel %vm1157, 1, 0
          %v1190 = vsel %vm1158, 1, 0
          %v1191 = vsel %vm1159, 1, 0
          %v1192 = vsel %vm1160, 1, 0
          %v1193 = vsel %vm1161, 1, 0
          %v1194 = vsel %vm1162, 1, 0
          %v1195 = vcvt.s32.f32 %v1163
          %v1196 = vcvt.s32.f32 %v1164
          %v1197 = vcvt.s32.f32 %v1165
          %v1198 = vcvt.s32.f32 %v1166
          %v1199 = vcvt.s32.f32 %v1167
          %v1200 = vcvt.s32.f32 %v1168
          %v1201 = vcvt.s32.f32 %v1169
          %v1202 = vcvt.s32.f32 %v1170
          %v1203 = vcvt.s32.f32 %v1171
          %v1204 = vcvt.s32.f32 %v1172
          %v1205 = vcvt.s32.f32 %v1173
          %v1206 = vcvt.s32.f32 %v1174
          %v1207 = vcvt.s32.f32 %v1175
          %v1208 = vcvt.s32.f32 %v1176
          %v1209 = vcvt.s32.f32 %v1177
          %v1210 = vcvt.s32.f32 %v1178
          %v1211 = vcvt.s32.f32 %v1179
          %v1212 = vcvt.s32.f32 %v1180
          %v1213 = vcvt.s32.f32 %v1181
          %v1214 = vcvt.s32.f32 %v1182
          %v1215 = vcvt.s32.f32 %v1183
          %v1216 = vcvt.s32.f32 %v1184
          %v1217 = vcvt.s32.f32 %v1185
          %v1218 = vcvt.s32.f32 %v1186
          %v1219 = vcvt.s32.f32 %v1187
          %v1220 = vcvt.s32.f32 %v1188
          %v1221 = vcvt.s32.f32 %v1189
          %v1222 = vcvt.s32.f32 %v1190
          %v1223 = vcvt.s32.f32 %v1191
          %v1224 = vcvt.s32.f32 %v1192
          %v1225 = vcvt.s32.f32 %v1193
          %v1226 = vcvt.s32.f32 %v1194
          %v1227 = vadd.f32 %v1195, %v1196
          %1228 = vadd.xlane.f32.xlu0 %v1227
          %v1229 = vpop.xlane.xlu0 %1228
          %v1230 = vadd.f32 %v1197, %v1198
          %1231 = vadd.xlane.f32.xlu0 %v1230
          %v1232 = vpop.xlane.xlu0 %1231
          %v1233 = vadd.f32 %v1199, %v1200
          %1234 = vadd.xlane.f32.xlu0 %v1233
          %v1235 = vpop.xlane.xlu0 %1234
          %v1236 = vadd.f32 %v1201, %v1202
          %1237 = vadd.xlane.f32.xlu0 %v1236
          %v1238 = vpop.xlane.xlu0 %1237
          %v1239 = vadd.f32 %v1203, %v1204
          %1240 = vadd.xlane.f32.xlu0 %v1239
          %v1241 = vpop.xlane.xlu0 %1240
          %v1242 = vadd.f32 %v1205, %v1206
          %1243 = vadd.xlane.f32.xlu0 %v1242
          %v1244 = vpop.xlane.xlu0 %1243
          %v1245 = vadd.f32 %v1207, %v1208
          %1246 = vadd.xlane.f32.xlu0 %v1245
          %v1247 = vpop.xlane.xlu0 %1246
          %v1248 = vadd.f32 %v1209, %v1210
          %1249 = vadd.xlane.f32.xlu0 %v1248
          %v1250 = vpop.xlane.xlu0 %1249
          %v1251 = vadd.f32 %v1211, %v1212
          %1252 = vadd.xlane.f32.xlu0 %v1251
          %v1253 = vpop.xlane.xlu0 %1252
          %v1254 = vadd.f32 %v1213, %v1214
          %1255 = vadd.xlane.f32.xlu0 %v1254
          %v1256 = vpop.xlane.xlu0 %1255
          %v1257 = vadd.f32 %v1215, %v1216
          %1258 = vadd.xlane.f32.xlu0 %v1257
          %v1259 = vpop.xlane.xlu0 %1258
          %v1260 = vadd.f32 %v1217, %v1218
          %1261 = vadd.xlane.f32.xlu0 %v1260
          %v1262 = vpop.xlane.xlu0 %1261
          %v1263 = vadd.f32 %v1219, %v1220
          %1264 = vadd.xlane.f32.xlu0 %v1263
          %v1265 = vpop.xlane.xlu0 %1264
          %v1266 = vadd.f32 %v1221, %v1222
          %1267 = vadd.xlane.f32.xlu0 %v1266
          %v1268 = vpop.xlane.xlu0 %1267
          %v1269 = vadd.f32 %v1223, %v1224
          %1270 = vadd.xlane.f32.xlu0 %v1269
          %v1271 = vpop.xlane.xlu0 %1270
          %v1272 = vadd.f32 %v1225, %v1226
          %1273 = vadd.xlane.f32.xlu0 %v1272
          %v1274 = vpop.xlane.xlu0 %1273
          %v1275 = vsub.f32 %v578, 0.4
          %v1276 = vsub.f32 %v579, 0.4
          %v1277 = vsub.f32 %v580, 0.4
          %v1278 = vsub.f32 %v581, 0.4
          %v1279 = vsub.f32 %v582, 0.4
          %v1280 = vsub.f32 %v583, 0.4
          %v1281 = vsub.f32 %v584, 0.4
          %v1282 = vsub.f32 %v585, 0.4
          %v1283 = vsub.f32 %v586, 0.4
          %v1284 = vsub.f32 %v587, 0.4
          %v1285 = vsub.f32 %v588, 0.4
          %v1286 = vsub.f32 %v589, 0.4
          %v1287 = vsub.f32 %v590, 0.4
          %v1288 = vsub.f32 %v591, 0.4
          %v1289 = vsub.f32 %v592, 0.4
          %v1290 = vsub.f32 %v593, 0.4
          %v1291 = vsub.f32 %v594, 0.4
          %v1292 = vsub.f32 %v595, 0.4
          %v1293 = vsub.f32 %v596, 0.4
          %v1294 = vsub.f32 %v597, 0.4
          %v1295 = vsub.f32 %v598, 0.4
          %v1296 = vsub.f32 %v599, 0.4
          %v1297 = vsub.f32 %v600, 0.4
          %v1298 = vsub.f32 %v601, 0.4
          %v1299 = vsub.f32 %v602, 0.4
          %v1300 = vsub.f32 %v603, 0.4
          %v1301 = vsub.f32 %v604, 0.4
          %v1302 = vsub.f32 %v605, 0.4
          %v1303 = vsub.f32 %v606, 0.4
          %v1304 = vsub.f32 %v607, 0.4
          %v1305 = vsub.f32 %v608, 0.4
          %v1306 = vsub.f32 %v609, 0.4
          %v1307 = vmul.f32 %v1275, -2.0
          %v1308 = vmul.f32 %v1276, -2.0
          %v1309 = vmul.f32 %v1277, -2.0
          %v1310 = vmul.f32 %v1278, -2.0
          %v1311 = vmul.f32 %v1279, -2.0
          %v1312 = vmul.f32 %v1280, -2.0
          %v1313 = vmul.f32 %v1281, -2.0
          %v1314 = vmul.f32 %v1282, -2.0
          %v1315 = vmul.f32 %v1283, -2.0
          %v1316 = vmul.f32 %v1284, -2.0
          %v1317 = vmul.f32 %v1285, -2.0
          %v1318 = vmul.f32 %v1286, -2.0
          %v1319 = vmul.f32 %v1287, -2.0
          %v1320 = vmul.f32 %v1288, -2.0
          %v1321 = vmul.f32 %v1289, -2.0
          %v1322 = vmul.f32 %v1290, -2.0
          %v1323 = vmul.f32 %v1291, -2.0
          %v1324 = vmul.f32 %v1292, -2.0
          %v1325 = vmul.f32 %v1293, -2.0
          %v1326 = vmul.f32 %v1294, -2.0
          %v1327 = vmul.f32 %v1295, -2.0
          %v1328 = vmul.f32 %v1296, -2.0
          %v1329 = vmul.f32 %v1297, -2.0
          %v1330 = vmul.f32 %v1298, -2.0
          %v1331 = vmul.f32 %v1299, -2.0
          %v1332 = vmul.f32 %v1300, -2.0
          %v1333 = vmul.f32 %v1301, -2.0
          %v1334 = vmul.f32 %v1302, -2.0
          %v1335 = vmul.f32 %v1303, -2.0
          %v1336 = vmul.f32 %v1304, -2.0
          %v1337 = vmul.f32 %v1305, -2.0
          %v1338 = vmul.f32 %v1306, -2.0
          %v1339 = vmul.f32 %v1275, 40.0
          %v1340 = vmul.f32 %v1276, 40.0
          %v1341 = vmul.f32 %v1277, 40.0
          %v1342 = vmul.f32 %v1278, 40.0
          %v1343 = vmul.f32 %v1279, 40.0
          %v1344 = vmul.f32 %v1280, 40.0
          %v1345 = vmul.f32 %v1281, 40.0
          %v1346 = vmul.f32 %v1282, 40.0
          %v1347 = vmul.f32 %v1283, 40.0
          %v1348 = vmul.f32 %v1284, 40.0
          %v1349 = vmul.f32 %v1285, 40.0
          %v1350 = vmul.f32 %v1286, 40.0
          %v1351 = vmul.f32 %v1287, 40.0
          %v1352 = vmul.f32 %v1288, 40.0
          %v1353 = vmul.f32 %v1289, 40.0
          %v1354 = vmul.f32 %v1290, 40.0
          %v1355 = vmul.f32 %v1291, 40.0
          %v1356 = vmul.f32 %v1292, 40.0
          %v1357 = vmul.f32 %v1293, 40.0
          %v1358 = vmul.f32 %v1294, 40.0
          %v1359 = vmul.f32 %v1295, 40.0
          %v1360 = vmul.f32 %v1296, 40.0
          %v1361 = vmul.f32 %v1297, 40.0
          %v1362 = vmul.f32 %v1298, 40.0
          %v1363 = vmul.f32 %v1299, 40.0
          %v1364 = vmul.f32 %v1300, 40.0
          %v1365 = vmul.f32 %v1301, 40.0
          %v1366 = vmul.f32 %v1302, 40.0
          %v1367 = vmul.f32 %v1303, 40.0
          %v1368 = vmul.f32 %v1304, 40.0
          %v1369 = vmul.f32 %v1305, 40.0
          %v1370 = vmul.f32 %v1306, 40.0
          %v1371 = vsel %vm683, %v1307, %v1339
          %v1372 = vsel %vm684, %v1308, %v1340
          %v1373 = vsel %vm685, %v1309, %v1341
          %v1374 = vsel %vm686, %v1310, %v1342
          %v1375 = vsel %vm687, %v1311, %v1343
          %v1376 = vsel %vm688, %v1312, %v1344
          %v1377 = vsel %vm689, %v1313, %v1345
          %v1378 = vsel %vm690, %v1314, %v1346
          %v1379 = vsel %vm691, %v1315, %v1347
          %v1380 = vsel %vm692, %v1316, %v1348
          %v1381 = vsel %vm693, %v1317, %v1349
          %v1382 = vsel %vm694, %v1318, %v1350
          %v1383 = vsel %vm695, %v1319, %v1351
          %v1384 = vsel %vm696, %v1320, %v1352
          %v1385 = vsel %vm697, %v1321, %v1353
          %v1386 = vsel %vm698, %v1322, %v1354
          %v1387 = vsel %vm699, %v1323, %v1355
          %v1388 = vsel %vm700, %v1324, %v1356
          %v1389 = vsel %vm701, %v1325, %v1357
          %v1390 = vsel %vm702, %v1326, %v1358
          %v1391 = vsel %vm703, %v1327, %v1359
          %v1392 = vsel %vm704, %v1328, %v1360
          %v1393 = vsel %vm705, %v1329, %v1361
          %v1394 = vsel %vm706, %v1330, %v1362
          %v1395 = vsel %vm707, %v1331, %v1363
          %v1396 = vsel %vm708, %v1332, %v1364
          %v1397 = vsel %vm709, %v1333, %v1365
          %v1398 = vsel %vm710, %v1334, %v1366
          %v1399 = vsel %vm711, %v1335, %v1367
          %v1400 = vsel %vm712, %v1336, %v1368
          %v1401 = vsel %vm713, %v1337, %v1369
          %v1402 = vsel %vm714, %v1338, %v1370
          %v1403 = vmax.f32 %v1371, 0.0
          %v1404 = vmax.f32 %v1372, 0.0
          %v1405 = vmax.f32 %v1373, 0.0
          %v1406 = vmax.f32 %v1374, 0.0
          %v1407 = vmax.f32 %v1375, 0.0
          %v1408 = vmax.f32 %v1376, 0.0
          %v1409 = vmax.f32 %v1377, 0.0
          %v1410 = vmax.f32 %v1378, 0.0
          %v1411 = vmax.f32 %v1379, 0.0
          %v1412 = vmax.f32 %v1380, 0.0
          %v1413 = vmax.f32 %v1381, 0.0
          %v1414 = vmax.f32 %v1382, 0.0
          %v1415 = vmax.f32 %v1383, 0.0
          %v1416 = vmax.f32 %v1384, 0.0
          %v1417 = vmax.f32 %v1385, 0.0
          %v1418 = vmax.f32 %v1386, 0.0
          %v1419 = vmax.f32 %v1387, 0.0
          %v1420 = vmax.f32 %v1388, 0.0
          %v1421 = vmax.f32 %v1389, 0.0
          %v1422 = vmax.f32 %v1390, 0.0
          %v1423 = vmax.f32 %v1391, 0.0
          %v1424 = vmax.f32 %v1392, 0.0
          %v1425 = vmax.f32 %v1393, 0.0
          %v1426 = vmax.f32 %v1394, 0.0
          %v1427 = vmax.f32 %v1395, 0.0
          %v1428 = vmax.f32 %v1396, 0.0
          %v1429 = vmax.f32 %v1397, 0.0
          %v1430 = vmax.f32 %v1398, 0.0
          %v1431 = vmax.f32 %v1399, 0.0
          %v1432 = vmax.f32 %v1400, 0.0
          %v1433 = vmax.f32 %v1401, 0.0
          %v1434 = vmax.f32 %v1402, 0.0
          %v1435 = vand.u32 2147483647, %v1371
          %v1436 = vand.u32 2147483647, %v1372
          %v1437 = vand.u32 2147483647, %v1373
          %v1438 = vand.u32 2147483647, %v1374
          %v1439 = vand.u32 2147483647, %v1375
          %v1440 = vand.u32 2147483647, %v1376
          %v1441 = vand.u32 2147483647, %v1377
          %v1442 = vand.u32 2147483647, %v1378
          %v1443 = vand.u32 2147483647, %v1379
          %v1444 = vand.u32 2147483647, %v1380
          %v1445 = vand.u32 2147483647, %v1381
          %v1446 = vand.u32 2147483647, %v1382
          %v1447 = vand.u32 2147483647, %v1383
          %v1448 = vand.u32 2147483647, %v1384
          %v1449 = vand.u32 2147483647, %v1385
          %v1450 = vand.u32 2147483647, %v1386
          %v1451 = vand.u32 2147483647, %v1387
          %v1452 = vand.u32 2147483647, %v1388
          %v1453 = vand.u32 2147483647, %v1389
          %v1454 = vand.u32 2147483647, %v1390
          %v1455 = vand.u32 2147483647, %v1391
          %v1456 = vand.u32 2147483647, %v1392
          %v1457 = vand.u32 2147483647, %v1393
          %v1458 = vand.u32 2147483647, %v1394
          %v1459 = vand.u32 2147483647, %v1395
          %v1460 = vand.u32 2147483647, %v1396
          %v1461 = vand.u32 2147483647, %v1397
          %v1462 = vand.u32 2147483647, %v1398
          %v1463 = vand.u32 2147483647, %v1399
          %v1464 = vand.u32 2147483647, %v1400
          %v1465 = vand.u32 2147483647, %v1401
          %v1466 = vand.u32 2147483647, %v1402
          %v1467 = vsub.f32 0.0, %v1435
          %v1468 = vsub.f32 0.0, %v1436
          %v1469 = vsub.f32 0.0, %v1437
          %v1470 = vsub.f32 0.0, %v1438
          %v1471 = vsub.f32 0.0, %v1439
          %v1472 = vsub.f32 0.0, %v1440
          %v1473 = vsub.f32 0.0, %v1441
          %v1474 = vsub.f32 0.0, %v1442
          %v1475 = vsub.f32 0.0, %v1443
          %v1476 = vsub.f32 0.0, %v1444
          %v1477 = vsub.f32 0.0, %v1445
          %v1478 = vsub.f32 0.0, %v1446
          %v1479 = vsub.f32 0.0, %v1447
          %v1480 = vsub.f32 0.0, %v1448
          %v1481 = vsub.f32 0.0, %v1449
          %v1482 = vsub.f32 0.0, %v1450
          %v1483 = vsub.f32 0.0, %v1451
          %v1484 = vsub.f32 0.0, %v1452
          %v1485 = vsub.f32 0.0, %v1453
          %v1486 = vsub.f32 0.0, %v1454
          %v1487 = vsub.f32 0.0, %v1455
          %v1488 = vsub.f32 0.0, %v1456
          %v1489 = vsub.f32 0.0, %v1457
          %v1490 = vsub.f32 0.0, %v1458
          %v1491 = vsub.f32 0.0, %v1459
          %v1492 = vsub.f32 0.0, %v1460
          %v1493 = vsub.f32 0.0, %v1461
          %v1494 = vsub.f32 0.0, %v1462
          %v1495 = vsub.f32 0.0, %v1463
          %v1496 = vsub.f32 0.0, %v1464
          %v1497 = vsub.f32 0.0, %v1465
          %v1498 = vsub.f32 0.0, %v1466
          %v1499 = vmul.f32 %v1467, 1.442695
          %v1500 = vpow.pop %v1499
          %v1501 = vmul.f32 %v1468, 1.442695
          %v1502 = vpow.pop %v1501
          %v1503 = vmul.f32 %v1469, 1.442695
          %v1504 = vpow.pop %v1503
          %v1505 = vmul.f32 %v1470, 1.442695
          %v1506 = vpow.pop %v1505
          %v1507 = vmul.f32 %v1471, 1.442695
          %v1508 = vpow.pop %v1507
          %v1509 = vmul.f32 %v1472, 1.442695
          %v1510 = vpow.pop %v1509
          %v1511 = vmul.f32 %v1473, 1.442695
          %v1512 = vpow.pop %v1511
          %v1513 = vmul.f32 %v1474, 1.442695
          %v1514 = vpow.pop %v1513
          %v1515 = vmul.f32 %v1475, 1.442695
          %v1516 = vpow.pop %v1515
          %v1517 = vmul.f32 %v1476, 1.442695
          %v1518 = vpow.pop %v1517
          %v1519 = vmul.f32 %v1477, 1.442695
          %v1520 = vpow.pop %v1519
          %v1521 = vmul.f32 %v1478, 1.442695
          %v1522 = vpow.pop %v1521
          %v1523 = vmul.f32 %v1479, 1.442695
          %v1524 = vpow.pop %v1523
          %v1525 = vmul.f32 %v1480, 1.442695
          %v1526 = vpow.pop %v1525
          %v1527 = vmul.f32 %v1481, 1.442695
          %v1528 = vpow.pop %v1527
          %v1529 = vmul.f32 %v1482, 1.442695
          %v1530 = vpow.pop %v1529
          %v1531 = vmul.f32 %v1483, 1.442695
          %v1532 = vpow.pop %v1531
          %v1533 = vmul.f32 %v1484, 1.442695
          %v1534 = vpow.pop %v1533
          %v1535 = vmul.f32 %v1485, 1.442695
          %v1536 = vpow.pop %v1535
          %v1537 = vmul.f32 %v1486, 1.442695
          %v1538 = vpow.pop %v1537
          %v1539 = vmul.f32 %v1487, 1.442695
          %v1540 = vpow.pop %v1539
          %v1541 = vmul.f32 %v1488, 1.442695
          %v1542 = vpow.pop %v1541
          %v1543 = vmul.f32 %v1489, 1.442695
          %v1544 = vpow.pop %v1543
          %v1545 = vmul.f32 %v1490, 1.442695
          %v1546 = vpow.pop %v1545
          %v1547 = vmul.f32 %v1491, 1.442695
          %v1548 = vpow.pop %v1547
          %v1549 = vmul.f32 %v1492, 1.442695
          %v1550 = vpow.pop %v1549
          %v1551 = vmul.f32 %v1493, 1.442695
          %v1552 = vpow.pop %v1551
          %v1553 = vmul.f32 %v1494, 1.442695
          %v1554 = vpow.pop %v1553
          %v1555 = vmul.f32 %v1495, 1.442695
          %v1556 = vpow.pop %v1555
          %v1557 = vmul.f32 %v1496, 1.442695
          %v1558 = vpow.pop %v1557
          %v1559 = vmul.f32 %v1497, 1.442695
          %v1560 = vpow.pop %v1559
          %v1561 = vmul.f32 %v1498, 1.442695
          %v1562 = vpow.pop %v1561
          %v1563 = vadd.f32 %v1500, 1.0
          %v1564 = vadd.f32 %v1502, 1.0
          %v1565 = vadd.f32 %v1504, 1.0
          %v1566 = vadd.f32 %v1506, 1.0
          %v1567 = vadd.f32 %v1508, 1.0
          %v1568 = vadd.f32 %v1510, 1.0
          %v1569 = vadd.f32 %v1512, 1.0
          %v1570 = vadd.f32 %v1514, 1.0
          %v1571 = vadd.f32 %v1516, 1.0
          %v1572 = vadd.f32 %v1518, 1.0
          %v1573 = vadd.f32 %v1520, 1.0
          %v1574 = vadd.f32 %v1522, 1.0
          %v1575 = vadd.f32 %v1524, 1.0
          %v1576 = vadd.f32 %v1526, 1.0
          %v1577 = vadd.f32 %v1528, 1.0
          %v1578 = vadd.f32 %v1530, 1.0
          %v1579 = vadd.f32 %v1532, 1.0
          %v1580 = vadd.f32 %v1534, 1.0
          %v1581 = vadd.f32 %v1536, 1.0
          %v1582 = vadd.f32 %v1538, 1.0
          %v1583 = vadd.f32 %v1540, 1.0
          %v1584 = vadd.f32 %v1542, 1.0
          %v1585 = vadd.f32 %v1544, 1.0
          %v1586 = vadd.f32 %v1546, 1.0
          %v1587 = vadd.f32 %v1548, 1.0
          %v1588 = vadd.f32 %v1550, 1.0
          %v1589 = vadd.f32 %v1552, 1.0
          %v1590 = vadd.f32 %v1554, 1.0
          %v1591 = vadd.f32 %v1556, 1.0
          %v1592 = vadd.f32 %v1558, 1.0
          %v1593 = vadd.f32 %v1560, 1.0
          %v1594 = vadd.f32 %v1562, 1.0
          %v1595 = vlog2.pop %v1563
          %v1596 = vmul.f32 %v1595, 0.6931472
          %v1597 = vlog2.pop %v1564
          %v1598 = vmul.f32 %v1597, 0.6931472
          %v1599 = vlog2.pop %v1565
          %v1600 = vmul.f32 %v1599, 0.6931472
          %v1601 = vlog2.pop %v1566
          %v1602 = vmul.f32 %v1601, 0.6931472
          %v1603 = vlog2.pop %v1567
          %v1604 = vmul.f32 %v1603, 0.6931472
          %v1605 = vlog2.pop %v1568
          %v1606 = vmul.f32 %v1605, 0.6931472
          %v1607 = vlog2.pop %v1569
          %v1608 = vmul.f32 %v1607, 0.6931472
          %v1609 = vlog2.pop %v1570
          %v1610 = vmul.f32 %v1609, 0.6931472
          %v1611 = vlog2.pop %v1571
          %v1612 = vmul.f32 %v1611, 0.6931472
          %v1613 = vlog2.pop %v1572
          %v1614 = vmul.f32 %v1613, 0.6931472
          %v1615 = vlog2.pop %v1573
          %v1616 = vmul.f32 %v1615, 0.6931472
          %v1617 = vlog2.pop %v1574
          %v1618 = vmul.f32 %v1617, 0.6931472
          %v1619 = vlog2.pop %v1575
          %v1620 = vmul.f32 %v1619, 0.6931472
          %v1621 = vlog2.pop %v1576
          %v1622 = vmul.f32 %v1621, 0.6931472
          %v1623 = vlog2.pop %v1577
          %v1624 = vmul.f32 %v1623, 0.6931472
          %v1625 = vlog2.pop %v1578
          %v1626 = vmul.f32 %v1625, 0.6931472
          %v1627 = vlog2.pop %v1579
          %v1628 = vmul.f32 %v1627, 0.6931472
          %v1629 = vlog2.pop %v1580
          %v1630 = vmul.f32 %v1629, 0.6931472
          %v1631 = vlog2.pop %v1581
          %v1632 = vmul.f32 %v1631, 0.6931472
          %v1633 = vlog2.pop %v1582
          %v1634 = vmul.f32 %v1633, 0.6931472
          %v1635 = vlog2.pop %v1583
          %v1636 = vmul.f32 %v1635, 0.6931472
          %v1637 = vlog2.pop %v1584
          %v1638 = vmul.f32 %v1637, 0.6931472
          %v1639 = vlog2.pop %v1585
          %v1640 = vmul.f32 %v1639, 0.6931472
          %v1641 = vlog2.pop %v1586
          %v1642 = vmul.f32 %v1641, 0.6931472
          %v1643 = vlog2.pop %v1587
          %v1644 = vmul.f32 %v1643, 0.6931472
          %v1645 = vlog2.pop %v1588
          %v1646 = vmul.f32 %v1645, 0.6931472
          %v1647 = vlog2.pop %v1589
          %v1648 = vmul.f32 %v1647, 0.6931472
          %v1649 = vlog2.pop %v1590
          %v1650 = vmul.f32 %v1649, 0.6931472
          %v1651 = vlog2.pop %v1591
          %v1652 = vmul.f32 %v1651, 0.6931472
          %v1653 = vlog2.pop %v1592
          %v1654 = vmul.f32 %v1653, 0.6931472
          %v1655 = vlog2.pop %v1593
          %v1656 = vmul.f32 %v1655, 0.6931472
          %v1657 = vlog2.pop %v1594
          %v1658 = vmul.f32 %v1657, 0.6931472
          %v1659 = vadd.f32 %v1403, %v1596
          %v1660 = vadd.f32 %v1404, %v1598
          %v1661 = vadd.f32 %v1405, %v1600
          %v1662 = vadd.f32 %v1406, %v1602
          %v1663 = vadd.f32 %v1407, %v1604
          %v1664 = vadd.f32 %v1408, %v1606
          %v1665 = vadd.f32 %v1409, %v1608
          %v1666 = vadd.f32 %v1410, %v1610
          %v1667 = vadd.f32 %v1411, %v1612
          %v1668 = vadd.f32 %v1412, %v1614
          %v1669 = vadd.f32 %v1413, %v1616
          %v1670 = vadd.f32 %v1414, %v1618
          %v1671 = vadd.f32 %v1415, %v1620
          %v1672 = vadd.f32 %v1416, %v1622
          %v1673 = vadd.f32 %v1417, %v1624
          %v1674 = vadd.f32 %v1418, %v1626
          %v1675 = vadd.f32 %v1419, %v1628
          %v1676 = vadd.f32 %v1420, %v1630
          %v1677 = vadd.f32 %v1421, %v1632
          %v1678 = vadd.f32 %v1422, %v1634
          %v1679 = vadd.f32 %v1423, %v1636
          %v1680 = vadd.f32 %v1424, %v1638
          %v1681 = vadd.f32 %v1425, %v1640
          %v1682 = vadd.f32 %v1426, %v1642
          %v1683 = vadd.f32 %v1427, %v1644
          %v1684 = vadd.f32 %v1428, %v1646
          %v1685 = vadd.f32 %v1429, %v1648
          %v1686 = vadd.f32 %v1430, %v1650
          %v1687 = vadd.f32 %v1431, %v1652
          %v1688 = vadd.f32 %v1432, %v1654
          %v1689 = vadd.f32 %v1433, %v1656
          %v1690 = vadd.f32 %v1434, %v1658
          %v1691 = vsel %vm779, %v1659, 0.0
          %v1692 = vsel %vm780, %v1660, 0.0
          %v1693 = vsel %vm781, %v1661, 0.0
          %v1694 = vsel %vm782, %v1662, 0.0
          %v1695 = vsel %vm783, %v1663, 0.0
          %v1696 = vsel %vm784, %v1664, 0.0
          %v1697 = vsel %vm785, %v1665, 0.0
          %v1698 = vsel %vm786, %v1666, 0.0
          %v1699 = vsel %vm787, %v1667, 0.0
          %v1700 = vsel %vm788, %v1668, 0.0
          %v1701 = vsel %vm789, %v1669, 0.0
          %v1702 = vsel %vm790, %v1670, 0.0
          %v1703 = vsel %vm791, %v1671, 0.0
          %v1704 = vsel %vm792, %v1672, 0.0
          %v1705 = vsel %vm793, %v1673, 0.0
          %v1706 = vsel %vm794, %v1674, 0.0
          %v1707 = vsel %vm795, %v1675, 0.0
          %v1708 = vsel %vm796, %v1676, 0.0
          %v1709 = vsel %vm797, %v1677, 0.0
          %v1710 = vsel %vm798, %v1678, 0.0
          %v1711 = vsel %vm799, %v1679, 0.0
          %v1712 = vsel %vm800, %v1680, 0.0
          %v1713 = vsel %vm801, %v1681, 0.0
          %v1714 = vsel %vm802, %v1682, 0.0
          %v1715 = vsel %vm803, %v1683, 0.0
          %v1716 = vsel %vm804, %v1684, 0.0
          %v1717 = vsel %vm805, %v1685, 0.0
          %v1718 = vsel %vm806, %v1686, 0.0
          %v1719 = vsel %vm807, %v1687, 0.0
          %v1720 = vsel %vm808, %v1688, 0.0
          %v1721 = vsel %vm809, %v1689, 0.0
          %v1722 = vsel %vm810, %v1690, 0.0
          %v1723 = vadd.f32 %v1691, %v1692
          %1724 = vadd.xlane.f32.xlu0 %v1723
          %v1725 = vpop.xlane.xlu0 %1724
          %v1726 = vadd.f32 %v1693, %v1694
          %1727 = vadd.xlane.f32.xlu0 %v1726
          %v1728 = vpop.xlane.xlu0 %1727
          %v1729 = vadd.f32 %v1695, %v1696
          %1730 = vadd.xlane.f32.xlu0 %v1729
          %v1731 = vpop.xlane.xlu0 %1730
          %v1732 = vadd.f32 %v1697, %v1698
          %1733 = vadd.xlane.f32.xlu0 %v1732
          %v1734 = vpop.xlane.xlu0 %1733
          %v1735 = vadd.f32 %v1699, %v1700
          %1736 = vadd.xlane.f32.xlu0 %v1735
          %v1737 = vpop.xlane.xlu0 %1736
          %v1738 = vadd.f32 %v1701, %v1702
          %1739 = vadd.xlane.f32.xlu0 %v1738
          %v1740 = vpop.xlane.xlu0 %1739
          %v1741 = vadd.f32 %v1703, %v1704
          %1742 = vadd.xlane.f32.xlu0 %v1741
          %v1743 = vpop.xlane.xlu0 %1742
          %v1744 = vadd.f32 %v1705, %v1706
          %1745 = vadd.xlane.f32.xlu0 %v1744
          %v1746 = vpop.xlane.xlu0 %1745
          %v1747 = vadd.f32 %v1707, %v1708
          %1748 = vadd.xlane.f32.xlu0 %v1747
          %v1749 = vpop.xlane.xlu0 %1748
          %v1750 = vadd.f32 %v1709, %v1710
          %1751 = vadd.xlane.f32.xlu0 %v1750
          %v1752 = vpop.xlane.xlu0 %1751
          %v1753 = vadd.f32 %v1711, %v1712
          %1754 = vadd.xlane.f32.xlu0 %v1753
          %v1755 = vpop.xlane.xlu0 %1754
          %v1756 = vadd.f32 %v1713, %v1714
          %1757 = vadd.xlane.f32.xlu0 %v1756
          %v1758 = vpop.xlane.xlu0 %1757
          %v1759 = vadd.f32 %v1715, %v1716
          %1760 = vadd.xlane.f32.xlu0 %v1759
          %v1761 = vpop.xlane.xlu0 %1760
          %v1762 = vadd.f32 %v1717, %v1718
          %1763 = vadd.xlane.f32.xlu0 %v1762
          %v1764 = vpop.xlane.xlu0 %1763
          %v1765 = vadd.f32 %v1719, %v1720
          %1766 = vadd.xlane.f32.xlu0 %v1765
          %v1767 = vpop.xlane.xlu0 %1766
          %v1768 = vadd.f32 %v1721, %v1722
          %1769 = vadd.xlane.f32.xlu0 %v1768
          %v1770 = vpop.xlane.xlu0 %1769
          %v1771 = vsel %vm1131, %v1659, 0.0
          %v1772 = vsel %vm1132, %v1660, 0.0
          %v1773 = vsel %vm1133, %v1661, 0.0
          %v1774 = vsel %vm1134, %v1662, 0.0
          %v1775 = vsel %vm1135, %v1663, 0.0
          %v1776 = vsel %vm1136, %v1664, 0.0
          %v1777 = vsel %vm1137, %v1665, 0.0
          %v1778 = vsel %vm1138, %v1666, 0.0
          %v1779 = vsel %vm1139, %v1667, 0.0
          %v1780 = vsel %vm1140, %v1668, 0.0
          %v1781 = vsel %vm1141, %v1669, 0.0
          %v1782 = vsel %vm1142, %v1670, 0.0
          %v1783 = vsel %vm1143, %v1671, 0.0
          %v1784 = vsel %vm1144, %v1672, 0.0
          %v1785 = vsel %vm1145, %v1673, 0.0
          %v1786 = vsel %vm1146, %v1674, 0.0
          %v1787 = vsel %vm1147, %v1675, 0.0
          %v1788 = vsel %vm1148, %v1676, 0.0
          %v1789 = vsel %vm1149, %v1677, 0.0
          %v1790 = vsel %vm1150, %v1678, 0.0
          %v1791 = vsel %vm1151, %v1679, 0.0
          %v1792 = vsel %vm1152, %v1680, 0.0
          %v1793 = vsel %vm1153, %v1681, 0.0
          %v1794 = vsel %vm1154, %v1682, 0.0
          %v1795 = vsel %vm1155, %v1683, 0.0
          %v1796 = vsel %vm1156, %v1684, 0.0
          %v1797 = vsel %vm1157, %v1685, 0.0
          %v1798 = vsel %vm1158, %v1686, 0.0
          %v1799 = vsel %vm1159, %v1687, 0.0
          %v1800 = vsel %vm1160, %v1688, 0.0
          %v1801 = vsel %vm1161, %v1689, 0.0
          %v1802 = vsel %vm1162, %v1690, 0.0
          %v1803 = vadd.f32 %v1771, %v1772
          %1804 = vadd.xlane.f32.xlu0 %v1803
          %v1805 = vpop.xlane.xlu0 %1804
          %v1806 = vadd.f32 %v1773, %v1774
          %1807 = vadd.xlane.f32.xlu0 %v1806
          %v1808 = vpop.xlane.xlu0 %1807
          %v1809 = vadd.f32 %v1775, %v1776
          %1810 = vadd.xlane.f32.xlu0 %v1809
          %v1811 = vpop.xlane.xlu0 %1810
          %v1812 = vadd.f32 %v1777, %v1778
          %1813 = vadd.xlane.f32.xlu0 %v1812
          %v1814 = vpop.xlane.xlu0 %1813
          %v1815 = vadd.f32 %v1779, %v1780
          %1816 = vadd.xlane.f32.xlu0 %v1815
          %v1817 = vpop.xlane.xlu0 %1816
          %v1818 = vadd.f32 %v1781, %v1782
          %1819 = vadd.xlane.f32.xlu0 %v1818
          %v1820 = vpop.xlane.xlu0 %1819
          %v1821 = vadd.f32 %v1783, %v1784
          %1822 = vadd.xlane.f32.xlu0 %v1821
          %v1823 = vpop.xlane.xlu0 %1822
          %v1824 = vadd.f32 %v1785, %v1786
          %1825 = vadd.xlane.f32.xlu0 %v1824
          %v1826 = vpop.xlane.xlu0 %1825
          %v1827 = vadd.f32 %v1787, %v1788
          %1828 = vadd.xlane.f32.xlu0 %v1827
          %v1829 = vpop.xlane.xlu0 %1828
          %v1830 = vadd.f32 %v1789, %v1790
          %1831 = vadd.xlane.f32.xlu0 %v1830
          %v1832 = vpop.xlane.xlu0 %1831
          %v1833 = vadd.f32 %v1791, %v1792
          %1834 = vadd.xlane.f32.xlu0 %v1833
          %v1835 = vpop.xlane.xlu0 %1834
          %v1836 = vadd.f32 %v1793, %v1794
          %1837 = vadd.xlane.f32.xlu0 %v1836
          %v1838 = vpop.xlane.xlu0 %1837
          %v1839 = vadd.f32 %v1795, %v1796
          %1840 = vadd.xlane.f32.xlu0 %v1839
          %v1841 = vpop.xlane.xlu0 %1840
          %v1842 = vadd.f32 %v1797, %v1798
          %1843 = vadd.xlane.f32.xlu0 %v1842
          %v1844 = vpop.xlane.xlu0 %1843
          %v1845 = vadd.f32 %v1799, %v1800
          %1846 = vadd.xlane.f32.xlu0 %v1845
          %v1847 = vpop.xlane.xlu0 %1846
          %v1848 = vadd.f32 %v1801, %v1802
          %1849 = vadd.xlane.f32.xlu0 %v1848
          %v1850 = vpop.xlane.xlu0 %1849
          %vm1851 = vcmp.ge.f32.partialorder %v877, 1.0
          %vm1852 = vcmp.ge.f32.partialorder %v880, 1.0
          %vm1853 = vcmp.ge.f32.partialorder %v883, 1.0
          %vm1854 = vcmp.ge.f32.partialorder %v886, 1.0
          %vm1855 = vcmp.ge.f32.partialorder %v889, 1.0
          %vm1856 = vcmp.ge.f32.partialorder %v892, 1.0
          %vm1857 = vcmp.ge.f32.partialorder %v895, 1.0
          %vm1858 = vcmp.ge.f32.partialorder %v898, 1.0
          %vm1859 = vcmp.ge.f32.partialorder %v901, 1.0
          %vm1860 = vcmp.ge.f32.partialorder %v904, 1.0
          %vm1861 = vcmp.ge.f32.partialorder %v907, 1.0
          %vm1862 = vcmp.ge.f32.partialorder %v910, 1.0
          %vm1863 = vcmp.ge.f32.partialorder %v913, 1.0
          %vm1864 = vcmp.ge.f32.partialorder %v916, 1.0
          %vm1865 = vcmp.ge.f32.partialorder %v919, 1.0
          %vm1866 = vcmp.ge.f32.partialorder %v922, 1.0
          %vm1867 = vcmp.ge.f32.partialorder %v1229, 1.0
          %vm1868 = vcmp.ge.f32.partialorder %v1232, 1.0
          %vm1869 = vcmp.ge.f32.partialorder %v1235, 1.0
          %vm1870 = vcmp.ge.f32.partialorder %v1238, 1.0
          %vm1871 = vcmp.ge.f32.partialorder %v1241, 1.0
          %vm1872 = vcmp.ge.f32.partialorder %v1244, 1.0
          %vm1873 = vcmp.ge.f32.partialorder %v1247, 1.0
          %vm1874 = vcmp.ge.f32.partialorder %v1250, 1.0
          %vm1875 = vcmp.ge.f32.partialorder %v1253, 1.0
          %vm1876 = vcmp.ge.f32.partialorder %v1256, 1.0
          %vm1877 = vcmp.ge.f32.partialorder %v1259, 1.0
          %vm1878 = vcmp.ge.f32.partialorder %v1262, 1.0
          %vm1879 = vcmp.ge.f32.partialorder %v1265, 1.0
          %vm1880 = vcmp.ge.f32.partialorder %v1268, 1.0
          %vm1881 = vcmp.ge.f32.partialorder %v1271, 1.0
          %vm1882 = vcmp.ge.f32.partialorder %v1274, 1.0
          %vm1883 = vmand %vm1851, %vm1867
          %vm1884 = vmand %vm1852, %vm1868
          %vm1885 = vmand %vm1853, %vm1869
          %vm1886 = vmand %vm1854, %vm1870
          %vm1887 = vmand %vm1855, %vm1871
          %vm1888 = vmand %vm1856, %vm1872
          %vm1889 = vmand %vm1857, %vm1873
          %vm1890 = vmand %vm1858, %vm1874
          %vm1891 = vmand %vm1859, %vm1875
          %vm1892 = vmand %vm1860, %vm1876
          %vm1893 = vmand %vm1861, %vm1877
          %vm1894 = vmand %vm1862, %vm1878
          %vm1895 = vmand %vm1863, %vm1879
          %vm1896 = vmand %vm1864, %vm1880
          %vm1897 = vmand %vm1865, %vm1881
          %vm1898 = vmand %vm1866, %vm1882
          %v1899 = vmax.f32 %v877, 1.0
          %v1900 = vmax.f32 %v880, 1.0
          %v1901 = vmax.f32 %v883, 1.0
          %v1902 = vmax.f32 %v886, 1.0
          %v1903 = vmax.f32 %v889, 1.0
          %v1904 = vmax.f32 %v892, 1.0
          %v1905 = vmax.f32 %v895, 1.0
          %v1906 = vmax.f32 %v898, 1.0
          %v1907 = vmax.f32 %v901, 1.0
          %v1908 = vmax.f32 %v904, 1.0
          %v1909 = vmax.f32 %v907, 1.0
          %v1910 = vmax.f32 %v910, 1.0
          %v1911 = vmax.f32 %v913, 1.0
          %v1912 = vmax.f32 %v916, 1.0
          %v1913 = vmax.f32 %v919, 1.0
          %v1914 = vmax.f32 %v922, 1.0
          %v1915 = vrcp.pop %v1899
          %v1916 = vmul.f32 %v1725, %v1915
          %v1917 = vrcp.pop %v1900
          %v1918 = vmul.f32 %v1728, %v1917
          %v1919 = vrcp.pop %v1901
          %v1920 = vmul.f32 %v1731, %v1919
          %v1921 = vrcp.pop %v1902
          %v1922 = vmul.f32 %v1734, %v1921
          %v1923 = vrcp.pop %v1903
          %v1924 = vmul.f32 %v1737, %v1923
          %v1925 = vrcp.pop %v1904
          %v1926 = vmul.f32 %v1740, %v1925
          %v1927 = vrcp.pop %v1905
          %v1928 = vmul.f32 %v1743, %v1927
          %v1929 = vrcp.pop %v1906
          %v1930 = vmul.f32 %v1746, %v1929
          %v1931 = vrcp.pop %v1907
          %v1932 = vmul.f32 %v1749, %v1931
          %v1933 = vrcp.pop %v1908
          %v1934 = vmul.f32 %v1752, %v1933
          %v1935 = vrcp.pop %v1909
          %v1936 = vmul.f32 %v1755, %v1935
          %v1937 = vrcp.pop %v1910
          %v1938 = vmul.f32 %v1758, %v1937
          %v1939 = vrcp.pop %v1911
          %v1940 = vmul.f32 %v1761, %v1939
          %v1941 = vrcp.pop %v1912
          %v1942 = vmul.f32 %v1764, %v1941
          %v1943 = vrcp.pop %v1913
          %v1944 = vmul.f32 %v1767, %v1943
          %v1945 = vrcp.pop %v1914
          %v1946 = vmul.f32 %v1770, %v1945
          %v1947 = vmax.f32 %v1229, 1.0
          %v1948 = vmax.f32 %v1232, 1.0
          %v1949 = vmax.f32 %v1235, 1.0
          %v1950 = vmax.f32 %v1238, 1.0
          %v1951 = vmax.f32 %v1241, 1.0
          %v1952 = vmax.f32 %v1244, 1.0
          %v1953 = vmax.f32 %v1247, 1.0
          %v1954 = vmax.f32 %v1250, 1.0
          %v1955 = vmax.f32 %v1253, 1.0
          %v1956 = vmax.f32 %v1256, 1.0
          %v1957 = vmax.f32 %v1259, 1.0
          %v1958 = vmax.f32 %v1262, 1.0
          %v1959 = vmax.f32 %v1265, 1.0
          %v1960 = vmax.f32 %v1268, 1.0
          %v1961 = vmax.f32 %v1271, 1.0
          %v1962 = vmax.f32 %v1274, 1.0
          %v1963 = vrcp.pop %v1947
          %v1964 = vmul.f32 %v1805, %v1963
          %v1965 = vrcp.pop %v1948
          %v1966 = vmul.f32 %v1808, %v1965
          %v1967 = vrcp.pop %v1949
          %v1968 = vmul.f32 %v1811, %v1967
          %v1969 = vrcp.pop %v1950
          %v1970 = vmul.f32 %v1814, %v1969
          %v1971 = vrcp.pop %v1951
          %v1972 = vmul.f32 %v1817, %v1971
          %v1973 = vrcp.pop %v1952
          %v1974 = vmul.f32 %v1820, %v1973
          %v1975 = vrcp.pop %v1953
          %v1976 = vmul.f32 %v1823, %v1975
          %v1977 = vrcp.pop %v1954
          %v1978 = vmul.f32 %v1826, %v1977
          %v1979 = vrcp.pop %v1955
          %v1980 = vmul.f32 %v1829, %v1979
          %v1981 = vrcp.pop %v1956
          %v1982 = vmul.f32 %v1832, %v1981
          %v1983 = vrcp.pop %v1957
          %v1984 = vmul.f32 %v1835, %v1983
          %v1985 = vrcp.pop %v1958
          %v1986 = vmul.f32 %v1838, %v1985
          %v1987 = vrcp.pop %v1959
          %v1988 = vmul.f32 %v1841, %v1987
          %v1989 = vrcp.pop %v1960
          %v1990 = vmul.f32 %v1844, %v1989
          %v1991 = vrcp.pop %v1961
          %v1992 = vmul.f32 %v1847, %v1991
          %v1993 = vrcp.pop %v1962
          %v1994 = vmul.f32 %v1850, %v1993
          %v1995 = vadd.f32 %v1916, %v1964
          %v1996 = vadd.f32 %v1918, %v1966
          %v1997 = vadd.f32 %v1920, %v1968
          %v1998 = vadd.f32 %v1922, %v1970
          %v1999 = vadd.f32 %v1924, %v1972
          %v2000 = vadd.f32 %v1926, %v1974
          %v2001 = vadd.f32 %v1928, %v1976
          %v2002 = vadd.f32 %v1930, %v1978
          %v2003 = vadd.f32 %v1932, %v1980
          %v2004 = vadd.f32 %v1934, %v1982
          %v2005 = vadd.f32 %v1936, %v1984
          %v2006 = vadd.f32 %v1938, %v1986
          %v2007 = vadd.f32 %v1940, %v1988
          %v2008 = vadd.f32 %v1942, %v1990
          %v2009 = vadd.f32 %v1944, %v1992
          %v2010 = vadd.f32 %v1946, %v1994
          %v2011 = vsel %vm1883, %v1995, 0.0
          %v2012 = vsel %vm1884, %v1996, 0.0
          %v2013 = vsel %vm1885, %v1997, 0.0
          %v2014 = vsel %vm1886, %v1998, 0.0
          %v2015 = vsel %vm1887, %v1999, 0.0
          %v2016 = vsel %vm1888, %v2000, 0.0
          %v2017 = vsel %vm1889, %v2001, 0.0
          %v2018 = vsel %vm1890, %v2002, 0.0
          %v2019 = vsel %vm1891, %v2003, 0.0
          %v2020 = vsel %vm1892, %v2004, 0.0
          %v2021 = vsel %vm1893, %v2005, 0.0
          %v2022 = vsel %vm1894, %v2006, 0.0
          %v2023 = vsel %vm1895, %v2007, 0.0
          %v2024 = vsel %vm1896, %v2008, 0.0
          %v2025 = vsel %vm1897, %v2009, 0.0
          %v2026 = vsel %vm1898, %v2010, 0.0
          %v2027 = vadd.f32 %v2011, %v2012
          %v2028 = vadd.f32 %v2027, %v2013
          %v2029 = vadd.f32 %v2028, %v2014
          %v2030 = vadd.f32 %v2029, %v2015
          %v2031 = vadd.f32 %v2030, %v2016
          %v2032 = vadd.f32 %v2031, %v2017
          %v2033 = vadd.f32 %v2032, %v2018
          %v2034 = vadd.f32 %v2033, %v2019
          %v2035 = vadd.f32 %v2034, %v2020
          %v2036 = vadd.f32 %v2035, %v2021
          %v2037 = vadd.f32 %v2036, %v2022
          %v2038 = vadd.f32 %v2037, %v2023
          %v2039 = vadd.f32 %v2038, %v2024
          %v2040 = vadd.f32 %v2039, %v2025
          %v2041 = vadd.f32 %v2040, %v2026
          %v2042 = vrot.slane %v2041, 4
          %v2043 = vadd.f32 %v2041, %v2042
          %v2044 = vrot.slane %v2043, 2
          %v2045 = vadd.f32 %v2043, %v2044
          %v2046 = vrot.slane %v2045, 1
          %v2047 = vadd.f32 %v2045, %v2046
          %2048 = vst [vmem:[%s300] sm:$0xff] %v2047
          %v2049 = vsel %vm809, %v608, 0.0
          %v2050 = vsel %vm810, %v609, 0.0
          %vm2051 = vcmask 1047559
          %v2052 = vsel %vm2051, %v2049, 0.0
          %v2053 = vsel %vm2051, %v2050, 0.0
          %v2054 = vadd.f32 %v2052, %v2053
          %2055 = vadd.xlane.f32.xlu0 %v2054
          %v2056 = vpop.xlane.xlu0 %2055
          %v2057 = vrcp.pop %v922
          %v2058 = vmul.f32 %v2056, %v2057
          %v2059 = vsel %vm1161, %v608, 0.0
          %v2060 = vsel %vm1162, %v609, 0.0
          %v2061 = vsel %vm2051, %v2059, 0.0
          %v2062 = vsel %vm2051, %v2060, 0.0
          %v2063 = vadd.f32 %v2061, %v2062
          %2064 = vadd.xlane.f32.xlu0 %v2063
          %v2065 = vpop.xlane.xlu0 %2064
          %v2066 = vsel %vm745, 1, 0
          %v2067 = vsel %vm746, 1, 0
          %v2068 = vcvt.s32.f32 %v2066
          %v2069 = vcvt.s32.f32 %v2067
          %v2070 = vsel %vm2051, %v2068, 0.0
          %v2071 = vsel %vm2051, %v2069, 0.0
          %v2072 = vadd.f32 %v2070, %v2071
          %2073 = vadd.xlane.f32.xlu0 %v2072
          %v2074 = vpop.xlane.xlu0 %2073
          %v2075 = vsel %vm745, %v608, 0.0
          %v2076 = vsel %vm746, %v609, 0.0
          %v2077 = vsel %vm2051, %v2075, 0.0
          %v2078 = vsel %vm2051, %v2076, 0.0
          %v2079 = vadd.f32 %v2077, %v2078
          %2080 = vadd.xlane.f32.xlu0 %v2079
          %v2081 = vpop.xlane.xlu0 %2080
          %v2082 = vrcp.pop %v1274
          %v2083 = vmul.f32 %v2065, %v2082
          %v2084 = vrcp.pop %v2074
          %v2085 = vmul.f32 %v2081, %v2084
          %v2086 = vsel %vm1866, %v2083, %v2085
          %v2087 = vlaneseq
          %v2088 = vshrl.u32 %v2087, 7
          %v2089 = vsub.s32 7, %v2088
          %v2090 = vrot.slane %v2058, %v2089
          %2091 = vst [vmem:[%s307] sm:$0xff] %v2090
          %v2092 = vlaneseq
          %v2093 = vshrl.u32 %v2092, 7
          %v2094 = vsub.s32 7, %v2093
          %v2095 = vrot.slane %v2086, %v2094
          %2096 = vst [vmem:[%s314] sm:$0xff] %v2095
        $region44: #{tpu_custom_call.1} parent=35 // pred_fallthru
          _
        %s2097 = sand.u32 %s144, 1
        %s2098 = scalar_lea.sflag [#allocation5], %s2097
        %s2099 = sand.u32 %s144, 1
        %s2100 = smul.addr %s2099, 8
        %s2101 = scalar_lea.vmem [#allocation6], %s2100
        %s2102 = sand.u32 %s25, 1
        %s2103 = scalar_lea.sflag [#allocation8], %s2102
        %s2104 = sand.u32 %s170, 1
        %s2105 = smul.addr %s2104, 8
        %s2106 = scalar_lea.vmem [#allocation7], %s2105
        %s2107 = sand.u32 %s25, 1
        %s2108 = scalar_lea.sflag [#allocation8], %s2107
        %s2109 = sand.u32 %s196, 1
        %s2110 = smul.addr %s2109, 8
        %s2111 = scalar_lea.vmem [#allocation9], %s2110
        // Predicated region
        $region45: #{tpu_custom_call.1} parent=35 // pred_check
          %p2112 = pneg %p154
        $region46: #{tpu_custom_call.1} parent=35 // pred_check_branch
          %2114 = sbr.rel (%p2112) target = $region48
        $region47: #{tpu_custom_call.1} parent=35 // pred_region
          %s2116 = ssub.s32 128, 128
          %2117 = vsyncadd %s2098, %s2116
          %s2118 = smul.addr %s29, 128
          %s2119 = scalar_lea.hbm %s4, %s2118
          %s2121 = sshll.u32 %s2101, 4
          %s2122 = int_to_ptr.vmem [resolvable:$true] %s2121
          %2124 = dma.vmem_to_hbm [thread:$0]  %s2122, 128, %s2119, %s2098
        $region48: #{tpu_custom_call.1} parent=35 // pred_fallthru
          _
        // Predicated region
        $region49: #{tpu_custom_call.1} parent=35 // pred_check
          %p2125 = pneg %p180
        $region50: #{tpu_custom_call.1} parent=35 // pred_check_branch
          %2127 = sbr.rel (%p2125) target = $region52
        $region51: #{tpu_custom_call.1} parent=35 // pred_region
          %s2129 = ssub.s32 128, 128
          %2130 = vsyncadd %s2103, %s2129
          %s2131 = smul.addr %s29, 128
          %s2132 = scalar_lea.hbm %s5, %s2131
          %s2134 = sshll.u32 %s2106, 4
          %s2135 = int_to_ptr.vmem [resolvable:$true] %s2134
          %2137 = dma.vmem_to_hbm [thread:$0]  %s2135, 128, %s2132, %s2103
        $region52: #{tpu_custom_call.1} parent=35 // pred_fallthru
          _
        // Predicated region
        $region53: #{tpu_custom_call.1} parent=35 // pred_check
          %p2138 = pneg %p206
        $region54: #{tpu_custom_call.1} parent=35 // pred_check_branch
          %2140 = sbr.rel (%p2138) target = $region56
        $region55: #{tpu_custom_call.1} parent=35 // pred_region
          %s2142 = ssub.s32 128, 128
          %2143 = vsyncadd %s2108, %s2142
          %s2144 = smul.addr %s29, 128
          %s2145 = scalar_lea.hbm %s6, %s2144
          %s2147 = sshll.u32 %s2111, 4
          %s2148 = int_to_ptr.vmem [resolvable:$true] %s2147
          %2150 = dma.vmem_to_hbm [thread:$0]  %s2148, 128, %s2145, %s2108
        $region56: #{tpu_custom_call.1} parent=35 // pred_fallthru
          _
      $region36: #{tpu_custom_call.1} parent=5 // pred_fallthru
        _
      %p2151 = scmp.le.s32.totalorder 2, %s20
      // Predicated region
      $region57: #{tpu_custom_call.1} parent=5 // pred_check
        %p2152 = pneg %p2151
      $region58: #{tpu_custom_call.1} parent=5 // pred_check_branch
        %2154 = sbr.rel (%p2152) target = $region60
      $region59: #{tpu_custom_call.1} parent=5 // pred_region
        %s2155 = ssub.s32 %s20, 2
        // Predicated region
        $region61: #{tpu_custom_call.1} parent=59 // pred_check
          %p2156 = pneg %p160
        $region62: #{tpu_custom_call.1} parent=59 // pred_check_branch
          %2158 = sbr.rel (%p2156) target = $region64
        $region63: #{tpu_custom_call.1} parent=59 // pred_region
          %s2159 = sand.u32 %s145, 1
          %s2160 = scalar_lea.sflag [#allocation5], %s2159
          %s2161 = sand.u32 %s145, 1
          %s2162 = smul.addr %s2161, 8
          %s2163 = scalar_lea.vmem [#allocation6], %s2162
          %2164 = dma.done %s2160, 128
        $region64: #{tpu_custom_call.1} parent=59 // pred_fallthru
          _
        // Predicated region
        $region65: #{tpu_custom_call.1} parent=59 // pred_check
          %p2165 = pneg %p186
        $region66: #{tpu_custom_call.1} parent=59 // pred_check_branch
          %2167 = sbr.rel (%p2165) target = $region68
        $region67: #{tpu_custom_call.1} parent=59 // pred_region
          %s2168 = sand.u32 %s26, 1
          %s2169 = scalar_lea.sflag [#allocation8], %s2168
          %s2170 = sand.u32 %s171, 1
          %s2171 = smul.addr %s2170, 8
          %s2172 = scalar_lea.vmem [#allocation7], %s2171
          %2173 = dma.done %s2169, 128
        $region68: #{tpu_custom_call.1} parent=59 // pred_fallthru
          _
        // Predicated region
        $region69: #{tpu_custom_call.1} parent=59 // pred_check
          %p2174 = pneg %p212
        $region70: #{tpu_custom_call.1} parent=59 // pred_check_branch
          %2176 = sbr.rel (%p2174) target = $region72
        $region71: #{tpu_custom_call.1} parent=59 // pred_region
          %s2177 = sand.u32 %s26, 1
          %s2178 = scalar_lea.sflag [#allocation8], %s2177
          %s2179 = sand.u32 %s197, 1
          %s2180 = smul.addr %s2179, 8
          %s2181 = scalar_lea.vmem [#allocation9], %s2180
          %2182 = dma.done %s2178, 128
        $region72: #{tpu_custom_call.1} parent=59 // pred_fallthru
          _
      $region60: #{tpu_custom_call.1} parent=5 // pred_fallthru
        _
    $region6: #{tpu_custom_call.1} parent=1 // loop_footer
      %s24 = sadd.s32 1, %s20
    $region7: #{tpu_custom_call.1} parent=1 // loop_footer_branch
      %19 = sbr.rel target = $region3
    $region8: #{tpu_custom_call.1} parent=1 // loop_exit
      _
    %2183 = vsyncpa [#allocation4], 1
    %s2184 = scalar_lea.sflag [#allocation4], 1
    %2185 = vsyncpa %s2184, 1
    %2186 = vsyncpa [#allocation5], 1
    %s2187 = scalar_lea.sflag [#allocation5], 1
    %2188 = vsyncpa %s2187, 1
    %2189 = vsyncpa [#allocation8], 1
    %s2190 = scalar_lea.sflag [#allocation8], 1
    %2191 = vsyncpa %s2190, 1

</llo_original>
